<compile_context>
chip_gen: v6e
topology: v6e:2x2x1
jax: 0.10.0
libtpu: 0.0.40
codegen_flags: <defaults>
</compile_context>

<pallas_src>
import functools
import numpy as np

import jax
import jax.numpy as jnp
from jax import lax
from jax.experimental import pallas as pl
from jax.experimental.pallas import tpu as pltpu

INFINITY_NUMBER = 1e12   # constant.INFINITY_NUMBER
PAD_ID = 0               # constant.PAD_ID
NER_VOCAB = 10           # stand-in for len(constant.NER_TO_ID)
REL_VOCAB = 44           # stand-in for len(constant.DEPREL_TO_ID); ids 42/43 used by forward


def _round_up(x, m):
    return ((x + m - 1) // m) * m


# ----------------------------------------------------------------------------
# Fused Pallas kernel: x-projection + State_LSTM + pool(max) + out_mlp
# ----------------------------------------------------------------------------
def _ggnn_fused_kernel(s_i_ref, s_o_ref, a_i_ref, a_o_ref, m_ref,
                       wx_ref, w1_ref, w2_ref, u1_ref, u2_ref, bp_ref,
                       *rest, B, N, E1, H, T, n_mlp, cdt):
    # rest = (Wm0, bm0, Wm1, bm1, ..., out_ref)
    mlp_refs = rest[:2 * n_mlp]
    o_ref = rest[2 * n_mlp]
    f32 = jnp.float32

    def mm(x3, w_ref):
        # (B,N,K) @ (K,M) -> (B,N,M); operands in cdt, f32 accumulation on MXU.
        b_, n_, k_ = x3.shape
        w = w_ref[...]
        y = jnp.dot(x3.reshape(b_ * n_, k_).astype(cdt), w,
                    preferred_element_type=f32)
        return y.reshape(b_, n_, w.shape[1])

    # x-projection: x = s_aug @ [Wx ; bx]  (degree column * bias folded in)
    x_i = mm(s_i_ref[...], wx_ref)                  # (B, N, H) f32
    x_o = mm(s_o_ref[...], wx_ref)                  # (B, N, H) f32

    # x-dependent gate pre-activation, once; gate order (input, output, forget, update)
    pre = mm(x_i, w1_ref) + mm(x_o, w2_ref) + bp_ref[...]        # (B, N, 4H)

    a_i = a_i_ref[...]                              # (B, N, N) cdt
    a_o = a_o_ref[...]

    def step(_, carry):
        h, c = carry                                # (B, N, H) f32 each
        hm = h.astype(cdt)
        h_i = jnp.einsum('bnm,bmh->bnh', a_i, hm, preferred_element_type=f32)
        h_o = jnp.einsum('bnm,bmh->bnh', a_o, hm, preferred_element_type=f32)
        gates = jax.nn.sigmoid(pre + mm(h_i, u1_ref) + mm(h_o, u2_ref))  # (B,N,4H)
        # TODO(synk): with H=32 the elementwise update runs at 25% lane occupancy;
        # lane-packing 4 samples' h/c would fill the vregs once this path matters.
        g_in = gates[:, :, 0 * H:1 * H]
        g_out = gates[:, :, 1 * H:2 * H]
        g_f = gates[:, :, 2 * H:3 * H]
        g_u = gates[:, :, 3 * H:4 * H]
        c = g_f * c + g_in * g_u
        h = g_out * jnp.tanh(c)
        return (h, c)

    h0 = jnp.zeros((B, N, H), f32)
    c0 = jnp.zeros((B, N, H), f32)
    h_fin, _ = lax.fori_loop(0, T, step, (h0, c0), unroll=True)

    # masked max-pool + out_mlp, while h is still resident in VMEM
    m = m_ref[...]                                  # (B, N, 2) int32 (1 == masked out)
    neg = jnp.float32(-INFINITY_NUMBER)
    subj = jnp.max(jnp.where(m[:, :, 0:1] > 0, neg, h_fin), axis=1)   # (B, H)
    obj = jnp.max(jnp.where(m[:, :, 1:2] > 0, neg, h_fin), axis=1)    # (B, H)
    out = jnp.concatenate([subj, obj], axis=1)                        # (B, 2H)
    for li in range(n_mlp):
        wm = mlp_refs[2 * li][...]
        bm = mlp_refs[2 * li + 1][...]
        out = jnp.maximum(jnp.dot(out, wm, preferred_element_type=f32) + bm, 0.0)
    o_ref[...] = out                                                  # (B, H)


def ggnn_fused(e_i, e_o, A_i, A_o, subj_mask, obj_mask, params, opt,
               use_bf16=True):
    """x-proj + State_LSTM + max-pool + out_mlp in one pallas_call, grid=(nb,)."""
    bs, N, _, E = e_i.shape
    H = opt["hidden_dim"]
    T = opt["time_steps"]
    f32 = jnp.float32

    # --- hoisted neighbor reduction (in f32): s = sum_j mask*e, deg appended
    def reduce_e(e, A):
        keep = (A > 0.0)[..., None]                                    # (bs,N,N,1)
        s = jnp.sum(jnp.where(keep, e.astype(f32), 0.0), axis=2)       # (bs,N,E)
        deg = jnp.sum((A > 0.0).astype(f32), axis=2, keepdims=True)    # (bs,N,1)
        return jnp.concatenate([s, deg], axis=-1)                      # (bs,N,E+1)

    s_i = reduce_e(e_i, A_i)
    s_o = reduce_e(e_o, A_o)
    E1 = E + 1

    # --- pooling masks packed as one (bs, N, 2) int32 tensor (1 == masked out)
    m = jnp.stack([jnp.asarray(subj_mask).astype(jnp.int32),
                   jnp.asarray(obj_mask).astype(jnp.int32)], axis=-1)

    # --- pad N to a sublane multiple (keeps all slices (8,128)-aligned)
    Np = _round_up(N, 8)
    if Np != N:
        pn = Np - N
        s_i = jnp.pad(s_i, ((0, 0), (0, pn), (0, 0)))
        s_o = jnp.pad(s_o, ((0, 0), (0, pn), (0, 0)))
        A_i = jnp.pad(A_i, ((0, 0), (0, pn), (0, pn)))
        A_o = jnp.pad(A_o, ((0, 0), (0, pn), (0, pn)))
        m = jnp.pad(m, ((0, 0), (0, pn), (0, 0)), constant_values=1)

    # --- batch blocking: B samples per grid step, grid length >= 2 when bs >= 2
    nb = 1 if bs == 1 else max(2, -(-bs // 8))
    B = -(-bs // nb)
    bs_p = nb * B
    if bs_p != bs:
        pb = bs_p - bs
        s_i = jnp.pad(s_i, ((0, pb), (0, 0), (0, 0)))
        s_o = jnp.pad(s_o, ((0, pb), (0, 0), (0, 0)))
        A_i = jnp.pad(A_i, ((0, pb), (0, 0), (0, 0)))
        A_o = jnp.pad(A_o, ((0, pb), (0, 0), (0, 0)))
        m = jnp.pad(m, ((0, pb), (0, 0), (0, 0)), constant_values=1)

    # --- pack weights: gate columns ordered (input, output, forget, update)
    W1, W2, U1, U2, b_g = (params["W1"], params["W2"], params["U1"],
                           params["U2"], params["b_g"])
    W1p = jnp.concatenate([W1[g] for g in range(4)], axis=1)       # (H, 4H)
    W2p = jnp.concatenate([W2[g] for g in range(4)], axis=1)       # (H, 4H)
    U1p = jnp.concatenate([U1[g] for g in range(4)], axis=1)       # (H, 4H)
    U2p = jnp.concatenate([U2[g] for g in range(4)], axis=1)       # (H, 4H)
    bp = jnp.concatenate([b_g[g] for g in range(4)], axis=1).astype(f32)  # (1, 4H)
    Wx_aug = jnp.concatenate([params["Wx"], params["bx"]], axis=0)        # (E+1, H)

    cdt = jnp.bfloat16 if use_bf16 else jnp.float32
    s_i, s_o = s_i.astype(cdt), s_o.astype(cdt)
    A_ic, A_oc = A_i.astype(cdt), A_o.astype(cdt)
    Wx_aug, W1p, W2p, U1p, U2p = (w.astype(cdt)
                                  for w in (Wx_aug, W1p, W2p, U1p, U2p))

    mlp = params["mlp"]
    n_mlp = len(mlp)
    mlp_arrays, mlp_specs = [], []
    for (Wm, bm) in mlp:
        din, dout = Wm.shape
        mlp_arrays += [Wm.astype(f32), bm.astype(f32)]
        mlp_specs += [pl.BlockSpec((din, dout), lambda i: (0, 0)),
                      pl.BlockSpec((1, dout), lambda i: (0, 0))]

    kern = functools.partial(_ggnn_fused_kernel, B=B, N=Np, E1=E1, H=H, T=T,
                             n_mlp=n_mlp, cdt=cdt)

    itemsize = 2 if use_bf16 else 4
    per_step = (2 * B * Np * E1 + 2 * B * Np * Np) * itemsize + B * Np * 2 * 4
    vmem_limit = int(min(48 * 1024 * 1024, max(32 * 1024 * 1024, 6 * per_step)))

    out = pl.pallas_call(
        kern,
        out_shape=jax.ShapeDtypeStruct((nb, B, H), f32),
        grid=(nb,),
        in_specs=[
            pl.BlockSpec((B, Np, E1), lambda i: (i, 0, 0)),   # s_i (+deg col)
            pl.BlockSpec((B, Np, E1), lambda i: (i, 0, 0)),   # s_o (+deg col)
            pl.BlockSpec((B, Np, Np), lambda i: (i, 0, 0)),   # A_i
            pl.BlockSpec((B, Np, Np), lambda i: (i, 0, 0)),   # A_o
            pl.BlockSpec((B, Np, 2), lambda i: (i, 0, 0)),    # masks
            pl.BlockSpec((E1, H), lambda i: (0, 0)),          # [Wx ; bx]
            pl.BlockSpec((H, 4 * H), lambda i: (0, 0)),       # W*1 pack
            pl.BlockSpec((H, 4 * H), lambda i: (0, 0)),       # W*2 pack
            pl.BlockSpec((H, 4 * H), lambda i: (0, 0)),       # U*1 pack
            pl.BlockSpec((H, 4 * H), lambda i: (0, 0)),       # U*2 pack
            pl.BlockSpec((1, 4 * H), lambda i: (0, 0)),       # gate bias pack
        ] + mlp_specs,
        out_specs=pl.BlockSpec((None, B, H), lambda i: (i, 0, 0)),
        compiler_params=pltpu.CompilerParams(
            dimension_semantics=("parallel",),
            vmem_limit_bytes=vmem_limit),
    )(s_i, s_o, A_ic, A_oc, m, Wx_aug, W1p, W2p, U1p, U2p, bp, *mlp_arrays)
    return out.reshape(bs_p, H)[:bs]


# ----------------------------------------------------------------------------
# Host-side graph construction (mirrors the Python loops in GGNNRelationModel.forward)
# ----------------------------------------------------------------------------
def build_graph(words, masks, ner, deprel, head):
    words = np.asarray(words)
    masks = np.asarray(masks)
    ner = np.asarray(ner)
    deprel = np.asarray(deprel)
    head = np.asarray(head)
    l = (masks == 0).astype(np.int64).sum(1)
    bs, N = words.shape

    def z():
        return np.zeros((bs, N, N), dtype=np.int32)

    rel_i_wds, rel_o_wds = z(), z()
    rel_i_ner, rel_o_ner = z(), z()
    rel_i_rel, rel_o_rel = z(), z()
    s_i_wds, s_o_wds, s_o1_wds = z(), z(), z()
    s_i_ner, s_o_ner, s_o1_ner = z(), z(), z()
    s_i_rel, s_o_rel, s_o1_rel = z(), z(), z()
    A_i = np.zeros((bs, N, N), np.float32)
    A_o = np.zeros((bs, N, N), np.float32)

    for i in range(bs):
        for j in range(N):
            if head[i][j] == 0:
                continue
            k = int(head[i][j]) - 1
            rel_i_wds[i][k][j] = words[i][j]
            rel_i_ner[i][k][j] = ner[i][j]
            rel_i_rel[i][k][j] = deprel[i][j]
            rel_o_wds[i][j][k] = words[i][j]
            rel_o_ner[i][j][k] = ner[i][j]
            rel_o_rel[i][j][k] = deprel[i][j]
            A_i[i][k][j] = 1
            A_o[i][j][k] = 1

    for i, t in enumerate(l):
        t = int(t)
        for j in range(t):
            rel_i_wds[i][j][j] = words[i][j]
            rel_o_wds[i][j][j] = words[i][j]
            rel_i_ner[i][j][j] = ner[i][j]
            rel_o_ner[i][j][j] = ner[i][j]
            rel_i_rel[i][j][j] = 43
            rel_o_rel[i][j][j] = 43
            A_i[i][j][j] = 1
            A_o[i][j][j] = 1
            if j == 0 or j == t - 1:
                continue
            s_i_wds[i][j][j - 1] = words[i][j]
            s_i_wds[i][j][j + 1] = words[i][j]
            s_i_ner[i][j][j - 1] = ner[i][j]
            s_i_ner[i][j][j + 1] = ner[i][j]
            s_i_rel[i][j][j - 1] = 42
            s_i_rel[i][j][j + 1] = 42
            s_o_wds[i][j][j] = words[i][j]
            s_o_ner[i][j][j] = ner[i][j]
            s_o_rel[i][j][j] = 42
            A_i[i][j][j - 1] = 1
            A_i[i][j][j + 1] = 1
            A_o[i][j][j - 1] = 1
            A_o[i][j][j + 1] = 1
        s_i_wds[i][0][1] = words[i][0]
        s_o1_wds[i][0][0] = words[i][0]
        s_i_ner[i][0][1] = ner[i][0]
        s_o1_ner[i][0][0] = ner[i][0]
        s_i_rel[i][0][1] = 42
        s_o1_rel[i][0][0] = 42
        A_i[i][0][1] = 1
        A_o[i][0][1] = 1
        s_i_wds[i][t - 1][t - 2] = words[i][t - 1]
        s_o1_wds[i][t - 1][t - 1] = words[i][t - 1]
        s_i_ner[i][t - 1][t - 2] = ner[i][t - 1]
        s_o1_ner[i][t - 1][t - 1] = ner[i][t - 1]
        s_i_rel[i][t - 1][t - 2] = 42
        s_o1_rel[i][t - 1][t - 1] = 42
        A_i[i][t - 1][t - 2] = 1
        A_o[i][t - 1][t - 2] = 1

    return (rel_i_wds, rel_o_wds, rel_i_ner, rel_o_ner, rel_i_rel, rel_o_rel,
            s_i_wds, s_o_wds, s_o1_wds, s_i_ner, s_o_ner, s_o1_ner,
            s_i_rel, s_o_rel, s_o1_rel, A_i, A_o)


def prepare(params, inputs):
    (words, masks, pos, ner, deprel, head, subj_pos, obj_pos,
     subj_type, obj_type, piece_pos) = inputs
    (rel_i_wds, rel_o_wds, rel_i_ner, rel_o_ner, rel_i_rel, rel_o_rel,
     s_i_wds, s_o_wds, s_o1_wds, s_i_ner, s_o_ner, s_o1_ner,
     s_i_rel, s_o_rel, s_o1_rel, A_i, A_o) = build_graph(words, masks, ner, deprel, head)

    E_rel, E_wds, E_ner = params["rel_emb"], params["emb"], params["ner_emb"]
    e_i_rel = E_rel[rel_i_rel] + E_rel[s_i_rel]
    e_i_wds = E_wds[rel_i_wds] + E_wds[s_i_wds]
    e_i_ner = E_ner[rel_i_ner] + E_ner[s_i_ner]
    e_o_rel = E_rel[rel_o_rel] + E_rel[s_o1_rel] + 2.0 * E_rel[s_o_rel]
    e_o_wds = E_wds[rel_o_wds] + E_wds[s_o1_wds] + 2.0 * E_wds[s_o_wds]
    e_o_ner = E_ner[rel_o_ner] + E_ner[s_o1_ner] + 2.0 * E_ner[s_o_ner]
    e_i = jnp.concatenate([e_i_rel, e_i_wds, e_i_ner], axis=3).astype(jnp.float32)
    e_o = jnp.concatenate([e_o_rel, e_o_wds, e_o_ner], axis=3).astype(jnp.float32)

    subj_mask = jnp.asarray(np.asarray(subj_pos) != 0)   # subj_pos.eq(0).eq(0)
    obj_mask = jnp.asarray(np.asarray(obj_pos) != 0)
    return e_i, e_o, jnp.asarray(A_i), jnp.asarray(A_o), subj_mask, obj_mask


# ----------------------------------------------------------------------------
# Full forward (pool_type='entity', pooling='max' configuration)
# ----------------------------------------------------------------------------
def ggnn_forward(params, inputs, opt, use_bf16=True):
    e_i, e_o, A_i, A_o, subj_mask, obj_mask = prepare(params, inputs)
    outputs = ggnn_fused(e_i, e_o, A_i, A_o, subj_mask, obj_mask, params, opt,
                         use_bf16=use_bf16)
    bs, N = e_i.shape[0], e_i.shape[1]
    # Reference (pool_type=='entity') returns h_out = torch.zeros(h.size()).
    h_out = jnp.zeros((bs, N, opt["hidden_dim"]), jnp.float32)
    # TODO(synk): only the opt['pool_type']=='entity' / opt['pooling']=='max' branch is
    # implemented; the 'piece'/'all' and 'avg'/'sum' variants follow the same kernel pattern.
    return outputs, h_out


# ----------------------------------------------------------------------------
# Plain-JAX reference of the same math (for the correctness check)
# ----------------------------------------------------------------------------
def ref_forward(params, e_i, e_o, A_i, A_o, subj_mask, obj_mask, opt):
    P = lax.Precision.HIGHEST
    Wx, bx = params["Wx"], params["bx"]

    def proj(e, A):
        x = jnp.einsum("bije,eh->bijh", e, Wx, precision=P) + bx.reshape(1, 1, 1, -1)
        x = jnp.where((A > 0)[..., None], x, 0.0)
        return x.sum(axis=2)

    x_i, x_o = proj(e_i, A_i), proj(e_o, A_o)
    bs, N, H = x_i.shape
    W1, W2, U1, U2, b = params["W1"], params["W2"], params["U1"], params["U2"], params["b_g"]

    def mm(x, w):
        return jnp.einsum("bnh,hk->bnk", x, w, precision=P)

    h = jnp.zeros((bs, N, H), jnp.float32)
    c = jnp.zeros((bs, N, H), jnp.float32)
    for _ in range(opt["time_steps"]):
        h_i = jnp.einsum("bnm,bmh->bnh", A_i, h, precision=P)
        h_o = jnp.einsum("bnm,bmh->bnh", A_o, h, precision=P)
        g = [jax.nn.sigmoid(mm(x_i, W1[k]) + mm(x_o, W2[k]) + mm(h_i, U1[k]) + mm(h_o, U2[k]) + b[k])
             for k in range(4)]
        c = g[2] * c + g[0] * g[3]
        h = g[1] * jnp.tanh(c)

    def pool(hh, mask):
        return jnp.max(jnp.where(mask[..., None], -INFINITY_NUMBER, hh), axis=1)

    out = jnp.concatenate([pool(h, subj_mask), pool(h, obj_mask)], axis=1)
    for Wm, bm in params["mlp"]:
        out = jnp.maximum(jnp.dot(out, Wm, precision=P) + bm, 0.0)
    return out


# ----------------------------------------------------------------------------
# Deterministic parameter init
# ----------------------------------------------------------------------------
def orthogonal(key, n, gain=1.414):
    a = np.asarray(jax.random.normal(key, (n, n), dtype=jnp.float32), dtype=np.float64)
    q, r = np.linalg.qr(a)
    q = q * np.sign(np.diag(r))[None, :]
    return jnp.asarray(gain * q, dtype=jnp.float32)


def init_params(key, opt):
    H = opt["hidden_dim"]
    e_dim = opt["emb_dim"] + opt["ner_dim"] + opt["edge_dim"]
    keys = list(jax.random.split(key, 40))
    nxt = iter(keys).__next__

    emb = jax.random.uniform(nxt(), (opt["vocab_size"], opt["emb_dim"]),
                             minval=-1.0, maxval=1.0, dtype=jnp.float32)
    emb = emb.at[PAD_ID].set(0.0)  # padding_idx row stays zero
    ner_emb = jax.random.normal(nxt(), (NER_VOCAB, opt["ner_dim"]), dtype=jnp.float32)
    rel_emb = jax.random.normal(nxt(), (REL_VOCAB, opt["edge_dim"]), dtype=jnp.float32)

    lim = 1.0 / np.sqrt(e_dim)
    Wx = jax.random.uniform(nxt(), (e_dim, H), minval=-lim, maxval=lim, dtype=jnp.float32)
    bx = jax.random.uniform(nxt(), (1, H), minval=-lim, maxval=lim, dtype=jnp.float32)

    # State_LSTM gate weights, stacked in gate order (input, output, forget, update).
    W1 = jnp.stack([orthogonal(nxt(), H) for _ in range(4)])
    W2 = jnp.stack([orthogonal(nxt(), H) for _ in range(4)])
    U1 = jnp.stack([orthogonal(nxt(), H) for _ in range(4)])
    U2 = jnp.stack([orthogonal(nxt(), H) for _ in range(4)])
    b_g = jnp.zeros((4, 1, H), jnp.float32)

    in_dim = 2 * H if opt["pool_type"] == "entity" else 3 * H
    mlp, d = [], in_dim
    for _ in range(opt["mlp_layers"]):
        lim = 1.0 / np.sqrt(d)
        Wm = jax.random.uniform(nxt(), (d, H), minval=-lim, maxval=lim, dtype=jnp.float32)
        bm = jax.random.uniform(nxt(), (1, H), minval=-lim, maxval=lim, dtype=jnp.float32)
        mlp.append((Wm, bm))
        d = H
    return dict(emb=emb, ner_emb=ner_emb, rel_emb=rel_emb, Wx=Wx, bx=bx,
                W1=W1, W2=W2, U1=U1, U2=U2, b_g=b_g, mlp=mlp)


# ----------------------------------------------------------------------------
# Main
# ----------------------------------------------------------------------------
if __name__ == "__main__":
    opt = dict(vocab_size=50, emb_dim=16, ner_dim=8, edge_dim=8, hidden_dim=32,
               time_steps=2, mlp_layers=2, pool_type="entity", pooling="max",
               cuda=False, topn=0)

    key = jax.random.PRNGKey(0)
    kp, kw, kn, kd = jax.random.split(key, 4)
    params = init_params(kp, opt)

    bs, N = 2, 8
    lengths = np.array([8, 6])
    masks = np.zeros((bs, N), np.int32)
    for i in range(bs):
        masks[i, lengths[i]:] = 1
    valid = (masks == 0).astype(np.int32)

    words = np.asarray(jax.random.randint(kw, (bs, N), 1, opt["vocab_size"])) * valid
    ner = np.asarray(jax.random.randint(kn, (bs, N), 1, NER_VOCAB)) * valid
    deprel = np.asarray(jax.random.randint(kd, (bs, N), 1, 40)) * valid
    head = np.zeros((bs, N), np.int32)
    for i in range(bs):
        for j in range(1, int(lengths[i])):
            head[i, j] = j  # parent of token j is token j-1 (1-indexed); token 0 is root
    pos = np.zeros((bs, N), np.int32)
    subj_idx = np.array([1, 2])
    obj_idx = np.array([4, 3])
    subj_pos = np.arange(N)[None, :] - subj_idx[:, None]
    obj_pos = np.arange(N)[None, :] - obj_idx[:, None]
    subj_type = np.zeros((bs,), np.int32)
    obj_type = np.zeros((bs,), np.int32)
    piece_pos = np.zeros((bs, 5), np.int32)  # unused for pool_type='entity'

    inputs = (words, masks, pos, ner, deprel, head, subj_pos, obj_pos,
              subj_type, obj_type, piece_pos)

    # optimized (bf16 matmul operands, f32 accumulation) forward
    outputs, h_out = ggnn_forward(params, inputs, opt, use_bf16=True)
    outputs = jax.block_until_ready(outputs)
    h_out = jax.block_until_ready(h_out)

    # correctness checks against plain-JAX reference of the same math
    e_i, e_o, A_i, A_o, subj_mask, obj_mask = prepare(params, inputs)
    ref_out = np.asarray(ref_forward(params, e_i, e_o, A_i, A_o, subj_mask, obj_mask, opt))

    assert outputs.shape == (bs, opt["hidden_dim"])
    assert h_out.shape == (bs, N, opt["hidden_dim"])
    assert np.all(np.isfinite(np.asarray(outputs)))
    # bf16-operand path: looser tolerance for the halved-mantissa matmul operands
    assert np.allclose(np.asarray(outputs), ref_out, atol=5e-2, rtol=5e-2)

    # f32 path: strict validation of the fused kernel math
    out_f32 = np.asarray(jax.block_until_ready(
        ggnn_fused(e_i, e_o, A_i, A_o, subj_mask, obj_mask, params, opt,
                   use_bf16=False)))
    assert np.allclose(out_f32, ref_out, atol=2e-2, rtol=2e-2)

    print("KERNEL_OK")
</pallas_src>

<mosaic_0001>
module attributes {stable_mosaic.version = 11 : i64} {
  func.func @_ggnn_fused_kernel(%arg0: i32, %arg1: memref<1x8x33xbf16, #tpu.memory_space<vmem>>, %arg2: memref<1x8x33xbf16, #tpu.memory_space<vmem>>, %arg3: memref<1x8x8xbf16, #tpu.memory_space<vmem>>, %arg4: memref<1x8x8xbf16, #tpu.memory_space<vmem>>, %arg5: memref<1x8x2xi32, #tpu.memory_space<vmem>>, %arg6: memref<33x32xbf16, #tpu.memory_space<vmem>>, %arg7: memref<32x128xbf16, #tpu.memory_space<vmem>>, %arg8: memref<32x128xbf16, #tpu.memory_space<vmem>>, %arg9: memref<32x128xbf16, #tpu.memory_space<vmem>>, %arg10: memref<32x128xbf16, #tpu.memory_space<vmem>>, %arg11: memref<1x128xf32, #tpu.memory_space<vmem>>, %arg12: memref<64x32xf32, #tpu.memory_space<vmem>>, %arg13: memref<1x32xf32, #tpu.memory_space<vmem>>, %arg14: memref<32x32xf32, #tpu.memory_space<vmem>>, %arg15: memref<1x32xf32, #tpu.memory_space<vmem>>, %arg16: memref<1x1x32xf32, #tpu.memory_space<vmem>>) attributes {dimension_semantics = [#tpu.dimension_semantics<parallel>], iteration_bounds = array<i64: 2>, scalar_prefetch = 0 : i64, scratch_operands = 0 : i64, tpu.core_type = #tpu.core_type<tc>, window_params = [{transform_indices = @transform_0, window_bounds = array<i64: 1, 8, 33>}, {transform_indices = @transform_1, window_bounds = array<i64: 1, 8, 33>}, {transform_indices = @transform_2, window_bounds = array<i64: 1, 8, 8>}, {transform_indices = @transform_3, window_bounds = array<i64: 1, 8, 8>}, {transform_indices = @transform_4, window_bounds = array<i64: 1, 8, 2>}, {pipeline_mode = #tpu.pipeline_mode<synchronous>, transform_indices = @transform_5, window_bounds = array<i64: 33, 32>}, {pipeline_mode = #tpu.pipeline_mode<synchronous>, transform_indices = @transform_6, window_bounds = array<i64: 32, 128>}, {pipeline_mode = #tpu.pipeline_mode<synchronous>, transform_indices = @transform_7, window_bounds = array<i64: 32, 128>}, {pipeline_mode = #tpu.pipeline_mode<synchronous>, transform_indices = @transform_8, window_bounds = array<i64: 32, 128>}, {pipeline_mode = #tpu.pipeline_mode<synchronous>, transform_indices = @transform_9, window_bounds = array<i64: 32, 128>}, {pipeline_mode = #tpu.pipeline_mode<synchronous>, transform_indices = @transform_10, window_bounds = array<i64: 1, 128>}, {pipeline_mode = #tpu.pipeline_mode<synchronous>, transform_indices = @transform_11, window_bounds = array<i64: 64, 32>}, {pipeline_mode = #tpu.pipeline_mode<synchronous>, transform_indices = @transform_12, window_bounds = array<i64: 1, 32>}, {pipeline_mode = #tpu.pipeline_mode<synchronous>, transform_indices = @transform_13, window_bounds = array<i64: 32, 32>}, {pipeline_mode = #tpu.pipeline_mode<synchronous>, transform_indices = @transform_14, window_bounds = array<i64: 1, 32>}, {transform_indices = @transform_15, window_bounds = array<i64: 1, 1, 32>}]} {
    %c0 = arith.constant 0 : index
    %c0_0 = arith.constant 0 : index
    %c0_1 = arith.constant 0 : index
    %0 = vector.load %arg1[%c0, %c0_0, %c0_1] : memref<1x8x33xbf16, #tpu.memory_space<vmem>>, vector<1x8x33xbf16>
    %c0_2 = arith.constant 0 : index
    %c0_3 = arith.constant 0 : index
    %1 = vector.load %arg6[%c0_2, %c0_3] : memref<33x32xbf16, #tpu.memory_space<vmem>>, vector<33x32xbf16>
    %2 = vector.shape_cast %0 : vector<1x8x33xbf16> to vector<8x33xbf16>
    %cst = arith.constant dense<0.000000e+00> : vector<8x32xf32>
    %3 = tpu.matmul %2, %1, %cst {dimension_numbers = #tpu.dot_dimension_numbers<[1], [0], [0], [1], [0, 0, 1, 1], [], []>} : vector<8x33xbf16>, vector<33x32xbf16>, vector<8x32xf32> -> vector<8x32xf32>
    %4 = vector.shape_cast %3 : vector<8x32xf32> to vector<1x8x32xf32>
    %c0_4 = arith.constant 0 : index
    %c0_5 = arith.constant 0 : index
    %c0_6 = arith.constant 0 : index
    %5 = vector.load %arg2[%c0_4, %c0_5, %c0_6] : memref<1x8x33xbf16, #tpu.memory_space<vmem>>, vector<1x8x33xbf16>
    %c0_7 = arith.constant 0 : index
    %c0_8 = arith.constant 0 : index
    %6 = vector.load %arg6[%c0_7, %c0_8] : memref<33x32xbf16, #tpu.memory_space<vmem>>, vector<33x32xbf16>
    %7 = vector.shape_cast %5 : vector<1x8x33xbf16> to vector<8x33xbf16>
    %cst_9 = arith.constant dense<0.000000e+00> : vector<8x32xf32>
    %8 = tpu.matmul %7, %6, %cst_9 {dimension_numbers = #tpu.dot_dimension_numbers<[1], [0], [0], [1], [0, 0, 1, 1], [], []>} : vector<8x33xbf16>, vector<33x32xbf16>, vector<8x32xf32> -> vector<8x32xf32>
    %9 = vector.shape_cast %8 : vector<8x32xf32> to vector<1x8x32xf32>
    %c0_10 = arith.constant 0 : index
    %c0_11 = arith.constant 0 : index
    %10 = vector.load %arg7[%c0_10, %c0_11] : memref<32x128xbf16, #tpu.memory_space<vmem>>, vector<32x128xbf16>
    %11 = vector.shape_cast %4 : vector<1x8x32xf32> to vector<8x32xf32>
    %12 = arith.truncf %11 : vector<8x32xf32> to vector<8x32xbf16>
    %cst_12 = arith.constant dense<0.000000e+00> : vector<8x128xf32>
    %13 = tpu.matmul %12, %10, %cst_12 {dimension_numbers = #tpu.dot_dimension_numbers<[1], [0], [0], [1], [0, 0, 1, 1], [], []>} : vector<8x32xbf16>, vector<32x128xbf16>, vector<8x128xf32> -> vector<8x128xf32>
    %14 = vector.shape_cast %13 : vector<8x128xf32> to vector<1x8x128xf32>
    %c0_13 = arith.constant 0 : index
    %c0_14 = arith.constant 0 : index
    %15 = vector.load %arg8[%c0_13, %c0_14] : memref<32x128xbf16, #tpu.memory_space<vmem>>, vector<32x128xbf16>
    %16 = vector.shape_cast %9 : vector<1x8x32xf32> to vector<8x32xf32>
    %17 = arith.truncf %16 : vector<8x32xf32> to vector<8x32xbf16>
    %cst_15 = arith.constant dense<0.000000e+00> : vector<8x128xf32>
    %18 = tpu.matmul %17, %15, %cst_15 {dimension_numbers = #tpu.dot_dimension_numbers<[1], [0], [0], [1], [0, 0, 1, 1], [], []>} : vector<8x32xbf16>, vector<32x128xbf16>, vector<8x128xf32> -> vector<8x128xf32>
    %19 = vector.shape_cast %18 : vector<8x128xf32> to vector<1x8x128xf32>
    %20 = arith.addf %14, %19 : vector<1x8x128xf32>
    %c0_16 = arith.constant 0 : index
    %c0_17 = arith.constant 0 : index
    %21 = vector.load %arg11[%c0_16, %c0_17] : memref<1x128xf32, #tpu.memory_space<vmem>>, vector<1x128xf32>
    %22 = vector.shape_cast %21 : vector<1x128xf32> to vector<1x1x128xf32>
    %23 = vector.broadcast %22 : vector<1x1x128xf32> to vector<1x8x128xf32>
    %24 = arith.addf %20, %23 : vector<1x8x128xf32>
    %c0_18 = arith.constant 0 : index
    %c0_19 = arith.constant 0 : index
    %c0_20 = arith.constant 0 : index
    %25 = vector.load %arg3[%c0_18, %c0_19, %c0_20] : memref<1x8x8xbf16, #tpu.memory_space<vmem>>, vector<1x8x8xbf16>
    %c0_21 = arith.constant 0 : index
    %c0_22 = arith.constant 0 : index
    %c0_23 = arith.constant 0 : index
    %26 = vector.load %arg4[%c0_21, %c0_22, %c0_23] : memref<1x8x8xbf16, #tpu.memory_space<vmem>>, vector<1x8x8xbf16>
    %cst_24 = arith.constant 0.000000e+00 : f32
    %27 = vector.broadcast %cst_24 : f32 to vector<1x8x32xf32>
    %cst_25 = arith.constant 0.000000e+00 : f32
    %28 = vector.broadcast %cst_25 : f32 to vector<1x8x32xf32>
    %c0_i32 = arith.constant 0 : i32
    %29 = arith.truncf %27 : vector<1x8x32xf32> to vector<1x8x32xbf16>
    "tpu.trace_start"() <{level = 10 : i32, message = "bnm,bmh->bnh"}> : () -> ()
    %cst_26 = arith.constant dense<0.000000e+00> : vector<1x8x32xf32>
    %30 = tpu.matmul %25, %29, %cst_26 {dimension_numbers = #tpu.dot_dimension_numbers<[2], [1], [1], [2], [0, 0, 0, 1, 1, 2], [0], [0]>} : vector<1x8x8xbf16>, vector<1x8x32xbf16>, vector<1x8x32xf32> -> vector<1x8x32xf32>
    %cst_27 = arith.constant dense<0.000000e+00> : vector<1x8x32xf32>
    %31 = tpu.matmul %26, %29, %cst_27 {dimension_numbers = #tpu.dot_dimension_numbers<[2], [1], [1], [2], [0, 0, 0, 1, 1, 2], [0], [0]>} : vector<1x8x8xbf16>, vector<1x8x32xbf16>, vector<1x8x32xf32> -> vector<1x8x32xf32>
    "tpu.trace_stop"() : () -> ()
    %c0_28 = arith.constant 0 : index
    %c0_29 = arith.constant 0 : index
    %32 = vector.load %arg9[%c0_28, %c0_29] : memref<32x128xbf16, #tpu.memory_space<vmem>>, vector<32x128xbf16>
    %33 = vector.shape_cast %30 : vector<1x8x32xf32> to vector<8x32xf32>
    %34 = arith.truncf %33 : vector<8x32xf32> to vector<8x32xbf16>
    %cst_30 = arith.constant dense<0.000000e+00> : vector<8x128xf32>
    %35 = tpu.matmul %34, %32, %cst_30 {dimension_numbers = #tpu.dot_dimension_numbers<[1], [0], [0], [1], [0, 0, 1, 1], [], []>} : vector<8x32xbf16>, vector<32x128xbf16>, vector<8x128xf32> -> vector<8x128xf32>
    %36 = vector.shape_cast %35 : vector<8x128xf32> to vector<1x8x128xf32>
    %37 = arith.addf %24, %36 : vector<1x8x128xf32>
    %c0_31 = arith.constant 0 : index
    %c0_32 = arith.constant 0 : index
    %38 = vector.load %arg10[%c0_31, %c0_32] : memref<32x128xbf16, #tpu.memory_space<vmem>>, vector<32x128xbf16>
    %39 = vector.shape_cast %31 : vector<1x8x32xf32> to vector<8x32xf32>
    %40 = arith.truncf %39 : vector<8x32xf32> to vector<8x32xbf16>
    %cst_33 = arith.constant dense<0.000000e+00> : vector<8x128xf32>
    %41 = tpu.matmul %40, %38, %cst_33 {dimension_numbers = #tpu.dot_dimension_numbers<[1], [0], [0], [1], [0, 0, 1, 1], [], []>} : vector<8x32xbf16>, vector<32x128xbf16>, vector<8x128xf32> -> vector<8x128xf32>
    %42 = vector.shape_cast %41 : vector<8x128xf32> to vector<1x8x128xf32>
    %43 = arith.addf %37, %42 : vector<1x8x128xf32>
    %44 = arith.negf %43 : vector<1x8x128xf32>
    %45 = math.exp %44 : vector<1x8x128xf32>
    %cst_34 = arith.constant 1.000000e+00 : f32
    %46 = vector.broadcast %cst_34 : f32 to vector<1x8x128xf32>
    %47 = arith.addf %46, %45 : vector<1x8x128xf32>
    %48 = arith.divf %46, %47 : vector<1x8x128xf32>
    %49 = vector.extract_strided_slice %48 {offsets = [0, 0, 0], sizes = [1, 8, 32], strides = [1, 1, 1]} : vector<1x8x128xf32> to vector<1x8x32xf32>
    %50 = vector.extract_strided_slice %48 {offsets = [0, 0, 32], sizes = [1, 8, 32], strides = [1, 1, 1]} : vector<1x8x128xf32> to vector<1x8x32xf32>
    %51 = vector.extract_strided_slice %48 {offsets = [0, 0, 64], sizes = [1, 8, 32], strides = [1, 1, 1]} : vector<1x8x128xf32> to vector<1x8x32xf32>
    %52 = vector.extract_strided_slice %48 {offsets = [0, 0, 96], sizes = [1, 8, 32], strides = [1, 1, 1]} : vector<1x8x128xf32> to vector<1x8x32xf32>
    %53 = arith.mulf %51, %28 : vector<1x8x32xf32>
    %54 = arith.mulf %49, %52 : vector<1x8x32xf32>
    %55 = arith.addf %53, %54 : vector<1x8x32xf32>
    %56 = math.tanh %55 : vector<1x8x32xf32>
    %57 = arith.mulf %50, %56 : vector<1x8x32xf32>
    %c1_i32 = arith.constant 1 : i32
    %58 = arith.truncf %57 : vector<1x8x32xf32> to vector<1x8x32xbf16>
    "tpu.trace_start"() <{level = 10 : i32, message = "bnm,bmh->bnh"}> : () -> ()
    %cst_35 = arith.constant dense<0.000000e+00> : vector<1x8x32xf32>
    %59 = tpu.matmul %25, %58, %cst_35 {dimension_numbers = #tpu.dot_dimension_numbers<[2], [1], [1], [2], [0, 0, 0, 1, 1, 2], [0], [0]>} : vector<1x8x8xbf16>, vector<1x8x32xbf16>, vector<1x8x32xf32> -> vector<1x8x32xf32>
    %cst_36 = arith.constant dense<0.000000e+00> : vector<1x8x32xf32>
    %60 = tpu.matmul %26, %58, %cst_36 {dimension_numbers = #tpu.dot_dimension_numbers<[2], [1], [1], [2], [0, 0, 0, 1, 1, 2], [0], [0]>} : vector<1x8x8xbf16>, vector<1x8x32xbf16>, vector<1x8x32xf32> -> vector<1x8x32xf32>
    "tpu.trace_stop"() : () -> ()
    %c0_37 = arith.constant 0 : index
    %c0_38 = arith.constant 0 : index
    %61 = vector.load %arg9[%c0_37, %c0_38] : memref<32x128xbf16, #tpu.memory_space<vmem>>, vector<32x128xbf16>
    %62 = vector.shape_cast %59 : vector<1x8x32xf32> to vector<8x32xf32>
    %63 = arith.truncf %62 : vector<8x32xf32> to vector<8x32xbf16>
    %cst_39 = arith.constant dense<0.000000e+00> : vector<8x128xf32>
    %64 = tpu.matmul %63, %61, %cst_39 {dimension_numbers = #tpu.dot_dimension_numbers<[1], [0], [0], [1], [0, 0, 1, 1], [], []>} : vector<8x32xbf16>, vector<32x128xbf16>, vector<8x128xf32> -> vector<8x128xf32>
    %65 = vector.shape_cast %64 : vector<8x128xf32> to vector<1x8x128xf32>
    %66 = arith.addf %24, %65 : vector<1x8x128xf32>
    %c0_40 = arith.constant 0 : index
    %c0_41 = arith.constant 0 : index
    %67 = vector.load %arg10[%c0_40, %c0_41] : memref<32x128xbf16, #tpu.memory_space<vmem>>, vector<32x128xbf16>
    %68 = vector.shape_cast %60 : vector<1x8x32xf32> to vector<8x32xf32>
    %69 = arith.truncf %68 : vector<8x32xf32> to vector<8x32xbf16>
    %cst_42 = arith.constant dense<0.000000e+00> : vector<8x128xf32>
    %70 = tpu.matmul %69, %67, %cst_42 {dimension_numbers = #tpu.dot_dimension_numbers<[1], [0], [0], [1], [0, 0, 1, 1], [], []>} : vector<8x32xbf16>, vector<32x128xbf16>, vector<8x128xf32> -> vector<8x128xf32>
    %71 = vector.shape_cast %70 : vector<8x128xf32> to vector<1x8x128xf32>
    %72 = arith.addf %66, %71 : vector<1x8x128xf32>
    %73 = arith.negf %72 : vector<1x8x128xf32>
    %74 = math.exp %73 : vector<1x8x128xf32>
    %cst_43 = arith.constant 1.000000e+00 : f32
    %75 = vector.broadcast %cst_43 : f32 to vector<1x8x128xf32>
    %76 = arith.addf %75, %74 : vector<1x8x128xf32>
    %77 = arith.divf %75, %76 : vector<1x8x128xf32>
    %78 = vector.extract_strided_slice %77 {offsets = [0, 0, 0], sizes = [1, 8, 32], strides = [1, 1, 1]} : vector<1x8x128xf32> to vector<1x8x32xf32>
    %79 = vector.extract_strided_slice %77 {offsets = [0, 0, 32], sizes = [1, 8, 32], strides = [1, 1, 1]} : vector<1x8x128xf32> to vector<1x8x32xf32>
    %80 = vector.extract_strided_slice %77 {offsets = [0, 0, 64], sizes = [1, 8, 32], strides = [1, 1, 1]} : vector<1x8x128xf32> to vector<1x8x32xf32>
    %81 = vector.extract_strided_slice %77 {offsets = [0, 0, 96], sizes = [1, 8, 32], strides = [1, 1, 1]} : vector<1x8x128xf32> to vector<1x8x32xf32>
    %82 = arith.mulf %80, %55 : vector<1x8x32xf32>
    %83 = arith.mulf %78, %81 : vector<1x8x32xf32>
    %84 = arith.addf %82, %83 : vector<1x8x32xf32>
    %85 = math.tanh %84 : vector<1x8x32xf32>
    %86 = arith.mulf %79, %85 : vector<1x8x32xf32>
    %c0_44 = arith.constant 0 : index
    %c0_45 = arith.constant 0 : index
    %c0_46 = arith.constant 0 : index
    %87 = vector.load %arg5[%c0_44, %c0_45, %c0_46] : memref<1x8x2xi32, #tpu.memory_space<vmem>>, vector<1x8x2xi32>
    %88 = vector.extract_strided_slice %87 {offsets = [0, 0, 0], sizes = [1, 8, 1], strides = [1, 1, 1]} : vector<1x8x2xi32> to vector<1x8x1xi32>
    %c0_i32_47 = arith.constant 0 : i32
    %89 = vector.broadcast %c0_i32_47 : i32 to vector<1x8x1xi32>
    %90 = arith.cmpi sgt, %88, %89 : vector<1x8x1xi32>
    %cst_48 = arith.constant -9.99999995E+11 : f32
    %91 = vector.shape_cast %90 : vector<1x8x1xi1> to vector<1x8x1xi1>
    %92 = vector.broadcast %91 : vector<1x8x1xi1> to vector<1x8x32xi1>
    %93 = vector.broadcast %cst_48 : f32 to vector<1x8x32xf32>
    %94 = arith.select %92, %93, %86 : vector<1x8x32xi1>, vector<1x8x32xf32>
    %cst_49 = arith.constant dense<0xFF800000> : vector<1x32xf32>
    %95 = vector.multi_reduction <maximumf>, %94, %cst_49 [1] : vector<1x8x32xf32> to vector<1x32xf32>
    %96 = vector.extract_strided_slice %87 {offsets = [0, 0, 1], sizes = [1, 8, 1], strides = [1, 1, 1]} : vector<1x8x2xi32> to vector<1x8x1xi32>
    %c0_i32_50 = arith.constant 0 : i32
    %97 = vector.broadcast %c0_i32_50 : i32 to vector<1x8x1xi32>
    %98 = arith.cmpi sgt, %96, %97 : vector<1x8x1xi32>
    %cst_51 = arith.constant -9.99999995E+11 : f32
    %99 = vector.shape_cast %98 : vector<1x8x1xi1> to vector<1x8x1xi1>
    %100 = vector.broadcast %99 : vector<1x8x1xi1> to vector<1x8x32xi1>
    %101 = vector.broadcast %cst_51 : f32 to vector<1x8x32xf32>
    %102 = arith.select %100, %101, %86 : vector<1x8x32xi1>, vector<1x8x32xf32>
    %cst_52 = arith.constant dense<0xFF800000> : vector<1x32xf32>
    %103 = vector.multi_reduction <maximumf>, %102, %cst_52 [1] : vector<1x8x32xf32> to vector<1x32xf32>
    %104 = tpu.concatenate %95, %103 in 1 : vector<1x32xf32>, vector<1x32xf32> -> vector<1x64xf32>
    %c0_53 = arith.constant 0 : index
    %c0_54 = arith.constant 0 : index
    %105 = vector.load %arg12[%c0_53, %c0_54] : memref<64x32xf32, #tpu.memory_space<vmem>>, vector<64x32xf32>
    %c0_55 = arith.constant 0 : index
    %c0_56 = arith.constant 0 : index
    %106 = vector.load %arg13[%c0_55, %c0_56] : memref<1x32xf32, #tpu.memory_space<vmem>>, vector<1x32xf32>
    %cst_57 = arith.constant dense<0.000000e+00> : vector<1x32xf32>
    %107 = tpu.matmul %104, %105, %cst_57 {dimension_numbers = #tpu.dot_dimension_numbers<[1], [0], [0], [1], [0, 0, 1, 1], [], []>} : vector<1x64xf32>, vector<64x32xf32>, vector<1x32xf32> -> vector<1x32xf32>
    %108 = arith.addf %107, %106 : vector<1x32xf32>
    %cst_58 = arith.constant 0.000000e+00 : f32
    %109 = vector.broadcast %cst_58 : f32 to vector<1x32xf32>
    %110 = arith.maximumf %108, %109 : vector<1x32xf32>
    %c0_59 = arith.constant 0 : index
    %c0_60 = arith.constant 0 : index
    %111 = vector.load %arg14[%c0_59, %c0_60] : memref<32x32xf32, #tpu.memory_space<vmem>>, vector<32x32xf32>
    %c0_61 = arith.constant 0 : index
    %c0_62 = arith.constant 0 : index
    %112 = vector.load %arg15[%c0_61, %c0_62] : memref<1x32xf32, #tpu.memory_space<vmem>>, vector<1x32xf32>
    %cst_63 = arith.constant dense<0.000000e+00> : vector<1x32xf32>
    %113 = tpu.matmul %110, %111, %cst_63 {dimension_numbers = #tpu.dot_dimension_numbers<[1], [0], [0], [1], [0, 0, 1, 1], [], []>} : vector<1x32xf32>, vector<32x32xf32>, vector<1x32xf32> -> vector<1x32xf32>
    %114 = arith.addf %113, %112 : vector<1x32xf32>
    %cst_64 = arith.constant 0.000000e+00 : f32
    %115 = vector.broadcast %cst_64 : f32 to vector<1x32xf32>
    %116 = arith.maximumf %114, %115 : vector<1x32xf32>
    %c0_65 = arith.constant 0 : index
    %c0_66 = arith.constant 0 : index
    %c0_67 = arith.constant 0 : index
    %117 = vector.load %arg16[%c0_65, %c0_66, %c0_67] : memref<1x1x32xf32, #tpu.memory_space<vmem>>, vector<1x1x32xf32>
    %118 = vector.shape_cast %117 : vector<1x1x32xf32> to vector<1x32xf32>
    %119 = vector.shape_cast %116 : vector<1x32xf32> to vector<1x1x32xf32>
    tpu.vector_store %arg16[%c0_65, %c0_66, %c0_67], %119 {strides = array<i32>} : memref<1x1x32xf32, #tpu.memory_space<vmem>>, vector<1x1x32xf32>,
    return
  }
  func.func @transform_0(%arg0: i32) -> (i32, i32, i32) {
    %c0_i32 = arith.constant 0 : i32
    %c0_i32_0 = arith.constant 0 : i32
    %c0_i32_1 = arith.constant 0 : i32
    return %arg0, %c0_i32, %c0_i32_0 : i32, i32, i32
  }
  func.func @transform_1(%arg0: i32) -> (i32, i32, i32) {
    %c0_i32 = arith.constant 0 : i32
    %c0_i32_0 = arith.constant 0 : i32
    %c0_i32_1 = arith.constant 0 : i32
    return %arg0, %c0_i32, %c0_i32_0 : i32, i32, i32
  }
  func.func @transform_2(%arg0: i32) -> (i32, i32, i32) {
    %c0_i32 = arith.constant 0 : i32
    %c0_i32_0 = arith.constant 0 : i32
    %c0_i32_1 = arith.constant 0 : i32
    return %arg0, %c0_i32, %c0_i32_0 : i32, i32, i32
  }
  func.func @transform_3(%arg0: i32) -> (i32, i32, i32) {
    %c0_i32 = arith.constant 0 : i32
    %c0_i32_0 = arith.constant 0 : i32
    %c0_i32_1 = arith.constant 0 : i32
    return %arg0, %c0_i32, %c0_i32_0 : i32, i32, i32
  }
  func.func @transform_4(%arg0: i32) -> (i32, i32, i32) {
    %c0_i32 = arith.constant 0 : i32
    %c0_i32_0 = arith.constant 0 : i32
    %c0_i32_1 = arith.constant 0 : i32
    return %arg0, %c0_i32, %c0_i32_0 : i32, i32, i32
  }
  func.func @transform_5(%arg0: i32) -> (i32, i32) {
    %c0_i32 = arith.constant 0 : i32
    %c0_i32_0 = arith.constant 0 : i32
    %c0_i32_1 = arith.constant 0 : i32
    return %c0_i32, %c0_i32_0 : i32, i32
  }
  func.func @transform_6(%arg0: i32) -> (i32, i32) {
    %c0_i32 = arith.constant 0 : i32
    %c0_i32_0 = arith.constant 0 : i32
    %c0_i32_1 = arith.constant 0 : i32
    return %c0_i32, %c0_i32_0 : i32, i32
  }
  func.func @transform_7(%arg0: i32) -> (i32, i32) {
    %c0_i32 = arith.constant 0 : i32
    %c0_i32_0 = arith.constant 0 : i32
    %c0_i32_1 = arith.constant 0 : i32
    return %c0_i32, %c0_i32_0 : i32, i32
  }
  func.func @transform_8(%arg0: i32) -> (i32, i32) {
    %c0_i32 = arith.constant 0 : i32
    %c0_i32_0 = arith.constant 0 : i32
    %c0_i32_1 = arith.constant 0 : i32
    return %c0_i32, %c0_i32_0 : i32, i32
  }
  func.func @transform_9(%arg0: i32) -> (i32, i32) {
    %c0_i32 = arith.constant 0 : i32
    %c0_i32_0 = arith.constant 0 : i32
    %c0_i32_1 = arith.constant 0 : i32
    return %c0_i32, %c0_i32_0 : i32, i32
  }
  func.func @transform_10(%arg0: i32) -> (i32, i32) {
    %c0_i32 = arith.constant 0 : i32
    %c0_i32_0 = arith.constant 0 : i32
    %c0_i32_1 = arith.constant 0 : i32
    return %c0_i32, %c0_i32_0 : i32, i32
  }
  func.func @transform_11(%arg0: i32) -> (i32, i32) {
    %c0_i32 = arith.constant 0 : i32
    %c0_i32_0 = arith.constant 0 : i32
    %c0_i32_1 = arith.constant 0 : i32
    return %c0_i32, %c0_i32_0 : i32, i32
  }
  func.func @transform_12(%arg0: i32) -> (i32, i32) {
    %c0_i32 = arith.constant 0 : i32
    %c0_i32_0 = arith.constant 0 : i32
    %c0_i32_1 = arith.constant 0 : i32
    return %c0_i32, %c0_i32_0 : i32, i32
  }
  func.func @transform_13(%arg0: i32) -> (i32, i32) {
    %c0_i32 = arith.constant 0 : i32
    %c0_i32_0 = arith.constant 0 : i32
    %c0_i32_1 = arith.constant 0 : i32
    return %c0_i32, %c0_i32_0 : i32, i32
  }
  func.func @transform_14(%arg0: i32) -> (i32, i32) {
    %c0_i32 = arith.constant 0 : i32
    %c0_i32_0 = arith.constant 0 : i32
    %c0_i32_1 = arith.constant 0 : i32
    return %c0_i32, %c0_i32_0 : i32, i32
  }
  func.func @transform_15(%arg0: i32) -> (i32, i32, i32) {
    %c0_i32 = arith.constant 0 : i32
    %c0_i32_0 = arith.constant 0 : i32
    %c0_i32_1 = arith.constant 0 : i32
    return %arg0, %c0_i32, %c0_i32_0 : i32, i32, i32
  }
}

</mosaic_0001>

<llo_original>
// kernel: tpu_custom_call.1
$region0: #{tpu_custom_call.1}
  #allocation0 [shape = 'u32[]', space=smem, size = 0x4, offset = 0x4, fixed_abs, tag = 'smem constant byte address 0x4 - core index']
  #allocation1 [shape = 'u32[144,128]{1,0:T(1,128)}', space=vmem, size = 0x12000, scoped, tag = 'internal scratch']
  %s0 = inlined_call_operand.vmem [shape: bf16[2,8,33], index: 0, kind: input, shape index: {}]
  %s1 = inlined_call_operand.vmem [shape: bf16[2,8,33], index: 1, kind: input, shape index: {}]
  %s2 = inlined_call_operand.hbm [shape: bf16[2,8,8], index: 2, kind: input, shape index: {}]
  %s3 = inlined_call_operand.hbm [shape: bf16[2,8,8], index: 3, kind: input, shape index: {}]
  %s4 = inlined_call_operand.vmem [shape: s32[2,8,2], index: 4, kind: input, shape index: {}]
  %s5 = inlined_call_operand.vmem [shape: bf16[33,32], index: 5, kind: input, shape index: {}]
  %s6 = inlined_call_operand.vmem [shape: bf16[32,128], index: 6, kind: input, shape index: {}]
  %s7 = inlined_call_operand.vmem [shape: bf16[32,128], index: 7, kind: input, shape index: {}]
  %s8 = inlined_call_operand.vmem [shape: bf16[32,128], index: 8, kind: input, shape index: {}]
  %s9 = inlined_call_operand.vmem [shape: bf16[32,128], index: 9, kind: input, shape index: {}]
  %s10 = inlined_call_operand.vmem [shape: f32[1,128], index: 10, kind: input, shape index: {}]
  %s11 = inlined_call_operand.vmem [shape: f32[64,32], index: 11, kind: input, shape index: {}]
  %s12 = inlined_call_operand.vmem [shape: f32[1,32], index: 12, kind: input, shape index: {}]
  %s13 = inlined_call_operand.vmem [shape: f32[32,32], index: 13, kind: input, shape index: {}]
  %s14 = inlined_call_operand.vmem [shape: f32[1,32], index: 14, kind: input, shape index: {}]
  %s15 = inlined_call_operand.hbm [shape: f32[2,1,32], index: 15, kind: output, shape index: {}]
  %s16 = sld [smem:[#allocation0]]
  $region101: #{tpu_custom_call.1} parent=0
    _
  %s18 = ssub.s32 1, %s16
  %s19 = scalar_select 0, %s18, %s16
  $region1: #{tpu_custom_call.1} parent=0
    #allocation2 [shape = 'u8[4096]{0}', space=vmem, size = 0x1000, scoped, tag = 'input window, operand 2']
    #allocation3 [shape = 's32[2]{0}', space=sflag, size = 0x8, scoped, tag = 'scoped memory for tpu_custom_call.1']
    #allocation4 [shape = 's32[2]{0}', space=sflag, size = 0x8, scoped, tag = 'scoped memory for tpu_custom_call.1']
    #allocation5 [shape = 'u8[4096]{0}', space=vmem, size = 0x1000, scoped, tag = 'input window, operand 3']
    #allocation6 [shape = 's32[2]{0}', space=sflag, size = 0x8, scoped, tag = 'scoped memory for tpu_custom_call.1']
    #allocation7 [shape = 'u8[1024]{0}', space=vmem, size = 0x400, scoped, tag = 'output window, operand 0']
    %20 = vsyncpa [#allocation3], 0
    %s21 = scalar_lea.sflag [#allocation3], 1
    %22 = vsyncpa %s21, 0
    %23 = vsyncpa [#allocation6], 0
    %s24 = scalar_lea.sflag [#allocation6], 1
    %25 = vsyncpa %s24, 0
    %26 = vsyncpa [#allocation4], 0
    %s27 = scalar_lea.sflag [#allocation4], 1
    %28 = vsyncpa %s27, 0
    loop: start=0, step=1, limit=4
    $region2: #{tpu_custom_call.1} parent=1 // loop_pre_header
      _
    $region3: #{tpu_custom_call.1} parent=1 // loop_header
      %s30 = sphi 0, %s34
      %p31 = scmp.ge.s32.totalorder %s30, 4
      %s40 = sphi 0, %s42
      %s43 = sphi 0, %s40
      %s44 = sphi 0, %s43
      %s60 = sphi 0, %s44
      %s66 = sphi 0, %s68
      %s69 = sphi 0, %s66
      %s70 = sphi 0, %s69
      %s86 = sphi 0, %s70
      %s92 = sphi 0, %s94
      %s95 = sphi 0, %s92
      %s96 = sphi 0, %s95
      %s112 = sphi 0, %s96
      %s118 = sphi 0, %s120
      %s121 = sphi 0, %s118
      %s122 = sphi 0, %s121
      %s138 = sphi 0, %s122
      %s144 = sphi 0, %s146
      %s147 = sphi 0, %s144
      %s148 = sphi 0, %s147
      %s164 = sphi 0, %s148
      %s168 = sphi 0, %s168
      %s170 = sphi 0, %s168
      %s171 = sphi 0, %s170
      %s185 = sphi 0, %s171
      %s189 = sphi 0, %s189
      %s191 = sphi 0, %s189
      %s192 = sphi 0, %s191
      %s206 = sphi 0, %s192
      %s210 = sphi 0, %s210
      %s212 = sphi 0, %s210
      %s213 = sphi 0, %s212
      %s227 = sphi 0, %s213
      %s231 = sphi 0, %s231
      %s233 = sphi 0, %s231
      %s234 = sphi 0, %s233
      %s248 = sphi 0, %s234
      %s252 = sphi 0, %s252
      %s254 = sphi 0, %s252
      %s255 = sphi 0, %s254
      %s269 = sphi 0, %s255
      %s273 = sphi 0, %s273
      %s275 = sphi 0, %s273
      %s276 = sphi 0, %s275
      %s290 = sphi 0, %s276
      %s294 = sphi 0, %s294
      %s296 = sphi 0, %s294
      %s297 = sphi 0, %s296
      %s311 = sphi 0, %s297
      %s315 = sphi 0, %s315
      %s317 = sphi 0, %s315
      %s318 = sphi 0, %s317
      %s332 = sphi 0, %s318
      %s336 = sphi 0, %s336
      %s338 = sphi 0, %s336
      %s339 = sphi 0, %s338
      %s353 = sphi 0, %s339
      %s357 = sphi 0, %s357
      %s359 = sphi 0, %s357
      %s360 = sphi 0, %s359
      %s374 = sphi 0, %s360
      %s380 = sphi 0, %s382
      %s383 = sphi 0, %s380
      %s384 = sphi 0, %s383
      %s400 = sphi 0, %s384
    $region4: #{tpu_custom_call.1} parent=1 // loop_header_branch
      %33 = sbr.rel (%p31) target = $region8
    $region5: #{tpu_custom_call.1} parent=1 // loop_body
      %s35 = ssub.s32 %s30, 1
      %s36 = ssub.s32 %s30, 2
      %s37 = sadd.s32 %s30, 1
      %s38 = ssub.s32 %s30, %s37
      %p39 = scmp.eq.s32.totalorder %s38, 0
      %s41 = sadd.s32 %s40, 1
      %s42 = scalar_select %p39, %s40, %s41
      %p45 = pneg %p39
      %p46 = scmp.eq.s32.totalorder %s30, 1
      %p47 = por %p45, %p46
      %p48 = scmp.ne.s32.totalorder %s40, %s43
      %p49 = scmp.eq.s32.totalorder %s30, 0
      %p50 = por %p48, %p49
      %p51 = scmp.ne.s32.totalorder %s40, %s43
      %p52 = scmp.eq.s32.totalorder %s35, 1
      %p53 = por %p51, %p52
      %p54 = scmp.ne.s32.totalorder %s43, %s44
      %p55 = scmp.eq.s32.totalorder %s35, 0
      %p56 = por %p54, %p55
      %p57 = scmp.ne.s32.totalorder %s43, %s44
      %p58 = scmp.eq.s32.totalorder %s36, 1
      %p59 = por %p57, %p58
      %p61 = scmp.ne.s32.totalorder %s44, %s60
      %p62 = scmp.eq.s32.totalorder %s36, 0
      %p63 = por %p61, %p62
      %s64 = ssub.s32 %s30, %s37
      %p65 = scmp.eq.s32.totalorder %s64, 0
      %s67 = sadd.s32 %s66, 1
      %s68 = scalar_select %p65, %s66, %s67
      %p71 = pneg %p65
      %p72 = scmp.eq.s32.totalorder %s30, 1
      %p73 = por %p71, %p72
      %p74 = scmp.ne.s32.totalorder %s66, %s69
      %p75 = scmp.eq.s32.totalorder %s30, 0
      %p76 = por %p74, %p75
      %p77 = scmp.ne.s32.totalorder %s66, %s69
      %p78 = scmp.eq.s32.totalorder %s35, 1
      %p79 = por %p77, %p78
      %p80 = scmp.ne.s32.totalorder %s69, %s70
      %p81 = scmp.eq.s32.totalorder %s35, 0
      %p82 = por %p80, %p81
      %p83 = scmp.ne.s32.totalorder %s69, %s70
      %p84 = scmp.eq.s32.totalorder %s36, 1
      %p85 = por %p83, %p84
      %p87 = scmp.ne.s32.totalorder %s70, %s86
      %p88 = scmp.eq.s32.totalorder %s36, 0
      %p89 = por %p87, %p88
      %s90 = ssub.s32 %s30, %s37
      %p91 = scmp.eq.s32.totalorder %s90, 0
      %s93 = sadd.s32 %s92, 1
      %s94 = scalar_select %p91, %s92, %s93
      %p97 = pneg %p91
      %p98 = scmp.eq.s32.totalorder %s30, 1
      %p99 = por %p97, %p98
      %p100 = scmp.ne.s32.totalorder %s92, %s95
      %p101 = scmp.eq.s32.totalorder %s30, 0
      %p102 = por %p100, %p101
      %p103 = scmp.ne.s32.totalorder %s92, %s95
      %p104 = scmp.eq.s32.totalorder %s35, 1
      %p105 = por %p103, %p104
      %p106 = scmp.ne.s32.totalorder %s95, %s96
      %p107 = scmp.eq.s32.totalorder %s35, 0
      %p108 = por %p106, %p107
      %p109 = scmp.ne.s32.totalorder %s95, %s96
      %p110 = scmp.eq.s32.totalorder %s36, 1
      %p111 = por %p109, %p110
      %p113 = scmp.ne.s32.totalorder %s96, %s112
      %p114 = scmp.eq.s32.totalorder %s36, 0
      %p115 = por %p113, %p114
      %s116 = ssub.s32 %s30, %s37
      %p117 = scmp.eq.s32.totalorder %s116, 0
      %s119 = sadd.s32 %s118, 1
      %s120 = scalar_select %p117, %s118, %s119
      %p123 = pneg %p117
      %p124 = scmp.eq.s32.totalorder %s30, 1
      %p125 = por %p123, %p124
      %p126 = scmp.ne.s32.totalorder %s118, %s121
      %p127 = scmp.eq.s32.totalorder %s30, 0
      %p128 = por %p126, %p127
      %p129 = scmp.ne.s32.totalorder %s118, %s121
      %p130 = scmp.eq.s32.totalorder %s35, 1
      %p131 = por %p129, %p130
      %p132 = scmp.ne.s32.totalorder %s121, %s122
      %p133 = scmp.eq.s32.totalorder %s35, 0
      %p134 = por %p132, %p133
      %p135 = scmp.ne.s32.totalorder %s121, %s122
      %p136 = scmp.eq.s32.totalorder %s36, 1
      %p137 = por %p135, %p136
      %p139 = scmp.ne.s32.totalorder %s122, %s138
      %p140 = scmp.eq.s32.totalorder %s36, 0
      %p141 = por %p139, %p140
      %s142 = ssub.s32 %s30, %s37
      %p143 = scmp.eq.s32.totalorder %s142, 0
      %s145 = sadd.s32 %s144, 1
      %s146 = scalar_select %p143, %s144, %s145
      %p149 = pneg %p143
      %p150 = scmp.eq.s32.totalorder %s30, 1
      %p151 = por %p149, %p150
      %p152 = scmp.ne.s32.totalorder %s144, %s147
      %p153 = scmp.eq.s32.totalorder %s30, 0
      %p154 = por %p152, %p153
      %p155 = scmp.ne.s32.totalorder %s144, %s147
      %p156 = scmp.eq.s32.totalorder %s35, 1
      %p157 = por %p155, %p156
      %p158 = scmp.ne.s32.totalorder %s147, %s148
      %p159 = scmp.eq.s32.totalorder %s35, 0
      %p160 = por %p158, %p159
      %p161 = scmp.ne.s32.totalorder %s147, %s148
      %p162 = scmp.eq.s32.totalorder %s36, 1
      %p163 = por %p161, %p162
      %p165 = scmp.ne.s32.totalorder %s148, %s164
      %p166 = scmp.eq.s32.totalorder %s36, 0
      %p167 = por %p165, %p166
      %s169 = sadd.s32 %s168, 1
      %p172 = scmp.eq.s32.totalorder %s30, 1
      %p173 = scmp.ne.s32.totalorder %s168, %s170
      %p174 = scmp.eq.s32.totalorder %s30, 0
      %p175 = por %p173, %p174
      %p176 = scmp.ne.s32.totalorder %s168, %s170
      %p177 = scmp.eq.s32.totalorder %s35, 1
      %p178 = por %p176, %p177
      %p179 = scmp.ne.s32.totalorder %s170, %s171
      %p180 = scmp.eq.s32.totalorder %s35, 0
      %p181 = por %p179, %p180
      %p182 = scmp.ne.s32.totalorder %s170, %s171
      %p183 = scmp.eq.s32.totalorder %s36, 1
      %p184 = por %p182, %p183
      %p186 = scmp.ne.s32.totalorder %s171, %s185
      %p187 = scmp.eq.s32.totalorder %s36, 0
      %p188 = por %p186, %p187
      %s190 = sadd.s32 %s189, 1
      %p193 = scmp.eq.s32.totalorder %s30, 1
      %p194 = scmp.ne.s32.totalorder %s189, %s191
      %p195 = scmp.eq.s32.totalorder %s30, 0
      %p196 = por %p194, %p195
      %p197 = scmp.ne.s32.totalorder %s189, %s191
      %p198 = scmp.eq.s32.totalorder %s35, 1
      %p199 = por %p197, %p198
      %p200 = scmp.ne.s32.totalorder %s191, %s192
      %p201 = scmp.eq.s32.totalorder %s35, 0
      %p202 = por %p200, %p201
      %p203 = scmp.ne.s32.totalorder %s191, %s192
      %p204 = scmp.eq.s32.totalorder %s36, 1
      %p205 = por %p203, %p204
      %p207 = scmp.ne.s32.totalorder %s192, %s206
      %p208 = scmp.eq.s32.totalorder %s36, 0
      %p209 = por %p207, %p208
      %s211 = sadd.s32 %s210, 1
      %p214 = scmp.eq.s32.totalorder %s30, 1
      %p215 = scmp.ne.s32.totalorder %s210, %s212
      %p216 = scmp.eq.s32.totalorder %s30, 0
      %p217 = por %p215, %p216
      %p218 = scmp.ne.s32.totalorder %s210, %s212
      %p219 = scmp.eq.s32.totalorder %s35, 1
      %p220 = por %p218, %p219
      %p221 = scmp.ne.s32.totalorder %s212, %s213
      %p222 = scmp.eq.s32.totalorder %s35, 0
      %p223 = por %p221, %p222
      %p224 = scmp.ne.s32.totalorder %s212, %s213
      %p225 = scmp.eq.s32.totalorder %s36, 1
      %p226 = por %p224, %p225
      %p228 = scmp.ne.s32.totalorder %s213, %s227
      %p229 = scmp.eq.s32.totalorder %s36, 0
      %p230 = por %p228, %p229
      %s232 = sadd.s32 %s231, 1
      %p235 = scmp.eq.s32.totalorder %s30, 1
      %p236 = scmp.ne.s32.totalorder %s231, %s233
      %p237 = scmp.eq.s32.totalorder %s30, 0
      %p238 = por %p236, %p237
      %p239 = scmp.ne.s32.totalorder %s231, %s233
      %p240 = scmp.eq.s32.totalorder %s35, 1
      %p241 = por %p239, %p240
      %p242 = scmp.ne.s32.totalorder %s233, %s234
      %p243 = scmp.eq.s32.totalorder %s35, 0
      %p244 = por %p242, %p243
      %p245 = scmp.ne.s32.totalorder %s233, %s234
      %p246 = scmp.eq.s32.totalorder %s36, 1
      %p247 = por %p245, %p246
      %p249 = scmp.ne.s32.totalorder %s234, %s248
      %p250 = scmp.eq.s32.totalorder %s36, 0
      %p251 = por %p249, %p250
      %s253 = sadd.s32 %s252, 1
      %p256 = scmp.eq.s32.totalorder %s30, 1
      %p257 = scmp.ne.s32.totalorder %s252, %s254
      %p258 = scmp.eq.s32.totalorder %s30, 0
      %p259 = por %p257, %p258
      %p260 = scmp.ne.s32.totalorder %s252, %s254
      %p261 = scmp.eq.s32.totalorder %s35, 1
      %p262 = por %p260, %p261
      %p263 = scmp.ne.s32.totalorder %s254, %s255
      %p264 = scmp.eq.s32.totalorder %s35, 0
      %p265 = por %p263, %p264
      %p266 = scmp.ne.s32.totalorder %s254, %s255
      %p267 = scmp.eq.s32.totalorder %s36, 1
      %p268 = por %p266, %p267
      %p270 = scmp.ne.s32.totalorder %s255, %s269
      %p271 = scmp.eq.s32.totalorder %s36, 0
      %p272 = por %p270, %p271
      %s274 = sadd.s32 %s273, 1
      %p277 = scmp.eq.s32.totalorder %s30, 1
      %p278 = scmp.ne.s32.totalorder %s273, %s275
      %p279 = scmp.eq.s32.totalorder %s30, 0
      %p280 = por %p278, %p279
      %p281 = scmp.ne.s32.totalorder %s273, %s275
      %p282 = scmp.eq.s32.totalorder %s35, 1
      %p283 = por %p281, %p282
      %p284 = scmp.ne.s32.totalorder %s275, %s276
      %p285 = scmp.eq.s32.totalorder %s35, 0
      %p286 = por %p284, %p285
      %p287 = scmp.ne.s32.totalorder %s275, %s276
      %p288 = scmp.eq.s32.totalorder %s36, 1
      %p289 = por %p287, %p288
      %p291 = scmp.ne.s32.totalorder %s276, %s290
      %p292 = scmp.eq.s32.totalorder %s36, 0
      %p293 = por %p291, %p292
      %s295 = sadd.s32 %s294, 1
      %p298 = scmp.eq.s32.totalorder %s30, 1
      %p299 = scmp.ne.s32.totalorder %s294, %s296
      %p300 = scmp.eq.s32.totalorder %s30, 0
      %p301 = por %p299, %p300
      %p302 = scmp.ne.s32.totalorder %s294, %s296
      %p303 = scmp.eq.s32.totalorder %s35, 1
      %p304 = por %p302, %p303
      %p305 = scmp.ne.s32.totalorder %s296, %s297
      %p306 = scmp.eq.s32.totalorder %s35, 0
      %p307 = por %p305, %p306
      %p308 = scmp.ne.s32.totalorder %s296, %s297
      %p309 = scmp.eq.s32.totalorder %s36, 1
      %p310 = por %p308, %p309
      %p312 = scmp.ne.s32.totalorder %s297, %s311
      %p313 = scmp.eq.s32.totalorder %s36, 0
      %p314 = por %p312, %p313
      %s316 = sadd.s32 %s315, 1
      %p319 = scmp.eq.s32.totalorder %s30, 1
      %p320 = scmp.ne.s32.totalorder %s315, %s317
      %p321 = scmp.eq.s32.totalorder %s30, 0
      %p322 = por %p320, %p321
      %p323 = scmp.ne.s32.totalorder %s315, %s317
      %p324 = scmp.eq.s32.totalorder %s35, 1
      %p325 = por %p323, %p324
      %p326 = scmp.ne.s32.totalorder %s317, %s318
      %p327 = scmp.eq.s32.totalorder %s35, 0
      %p328 = por %p326, %p327
      %p329 = scmp.ne.s32.totalorder %s317, %s318
      %p330 = scmp.eq.s32.totalorder %s36, 1
      %p331 = por %p329, %p330
      %p333 = scmp.ne.s32.totalorder %s318, %s332
      %p334 = scmp.eq.s32.totalorder %s36, 0
      %p335 = por %p333, %p334
      %s337 = sadd.s32 %s336, 1
      %p340 = scmp.eq.s32.totalorder %s30, 1
      %p341 = scmp.ne.s32.totalorder %s336, %s338
      %p342 = scmp.eq.s32.totalorder %s30, 0
      %p343 = por %p341, %p342
      %p344 = scmp.ne.s32.totalorder %s336, %s338
      %p345 = scmp.eq.s32.totalorder %s35, 1
      %p346 = por %p344, %p345
      %p347 = scmp.ne.s32.totalorder %s338, %s339
      %p348 = scmp.eq.s32.totalorder %s35, 0
      %p349 = por %p347, %p348
      %p350 = scmp.ne.s32.totalorder %s338, %s339
      %p351 = scmp.eq.s32.totalorder %s36, 1
      %p352 = por %p350, %p351
      %p354 = scmp.ne.s32.totalorder %s339, %s353
      %p355 = scmp.eq.s32.totalorder %s36, 0
      %p356 = por %p354, %p355
      %s358 = sadd.s32 %s357, 1
      %p361 = scmp.eq.s32.totalorder %s30, 1
      %p362 = scmp.ne.s32.totalorder %s357, %s359
      %p363 = scmp.eq.s32.totalorder %s30, 0
      %p364 = por %p362, %p363
      %p365 = scmp.ne.s32.totalorder %s357, %s359
      %p366 = scmp.eq.s32.totalorder %s35, 1
      %p367 = por %p365, %p366
      %p368 = scmp.ne.s32.totalorder %s359, %s360
      %p369 = scmp.eq.s32.totalorder %s35, 0
      %p370 = por %p368, %p369
      %p371 = scmp.ne.s32.totalorder %s359, %s360
      %p372 = scmp.eq.s32.totalorder %s36, 1
      %p373 = por %p371, %p372
      %p375 = scmp.ne.s32.totalorder %s360, %s374
      %p376 = scmp.eq.s32.totalorder %s36, 0
      %p377 = por %p375, %p376
      %s378 = ssub.s32 %s30, %s37
      %p379 = scmp.eq.s32.totalorder %s378, 0
      %s381 = sadd.s32 %s380, 1
      %s382 = scalar_select %p379, %s380, %s381
      %p385 = pneg %p379
      %p386 = scmp.eq.s32.totalorder %s30, 1
      %p387 = por %p385, %p386
      %p388 = scmp.ne.s32.totalorder %s380, %s383
      %p389 = scmp.eq.s32.totalorder %s30, 0
      %p390 = por %p388, %p389
      %p391 = scmp.ne.s32.totalorder %s380, %s383
      %p392 = scmp.eq.s32.totalorder %s35, 1
      %p393 = por %p391, %p392
      %p394 = scmp.ne.s32.totalorder %s383, %s384
      %p395 = scmp.eq.s32.totalorder %s35, 0
      %p396 = por %p394, %p395
      %p397 = scmp.ne.s32.totalorder %s383, %s384
      %p398 = scmp.eq.s32.totalorder %s36, 1
      %p399 = por %p397, %p398
      %p401 = scmp.ne.s32.totalorder %s384, %s400
      %p402 = scmp.eq.s32.totalorder %s36, 0
      %p403 = por %p401, %p402
      %p404 = scmp.le.s32.totalorder 1, %s30
      %p405 = scmp.lt.s32.totalorder %s30, 3
      %p406 = pnand %p404, %p405
      %p407 = pneg %p406
      // Predicated region
      $region9: #{tpu_custom_call.1} parent=5 // pred_check
        _
      $region10: #{tpu_custom_call.1} parent=5 // pred_check_branch
        %409 = sbr.rel (%p406) target = $region12
      $region11: #{tpu_custom_call.1} parent=5 // pred_region
        %s410 = ssub.s32 %s30, 1
        // Predicated region
        $region13: #{tpu_custom_call.1} parent=11 // pred_check
          %p411 = pneg %p181
        $region14: #{tpu_custom_call.1} parent=11 // pred_check_branch
          %413 = sbr.rel (%p411) target = $region16
        $region15: #{tpu_custom_call.1} parent=11 // pred_region
          _
        $region16: #{tpu_custom_call.1} parent=11 // pred_fallthru
          _
        // Predicated region
        $region17: #{tpu_custom_call.1} parent=11 // pred_check
          %p414 = pneg %p202
        $region18: #{tpu_custom_call.1} parent=11 // pred_check_branch
          %416 = sbr.rel (%p414) target = $region20
        $region19: #{tpu_custom_call.1} parent=11 // pred_region
          _
        $region20: #{tpu_custom_call.1} parent=11 // pred_fallthru
          _
        // Predicated region
        $region21: #{tpu_custom_call.1} parent=11 // pred_check
          %p417 = pneg %p223
        $region22: #{tpu_custom_call.1} parent=11 // pred_check_branch
          %419 = sbr.rel (%p417) target = $region24
        $region23: #{tpu_custom_call.1} parent=11 // pred_region
          _
        $region24: #{tpu_custom_call.1} parent=11 // pred_fallthru
          _
        // Predicated region
        $region25: #{tpu_custom_call.1} parent=11 // pred_check
          %p420 = pneg %p244
        $region26: #{tpu_custom_call.1} parent=11 // pred_check_branch
          %422 = sbr.rel (%p420) target = $region28
        $region27: #{tpu_custom_call.1} parent=11 // pred_region
          _
        $region28: #{tpu_custom_call.1} parent=11 // pred_fallthru
          _
        // Predicated region
        $region29: #{tpu_custom_call.1} parent=11 // pred_check
          %p423 = pneg %p265
        $region30: #{tpu_custom_call.1} parent=11 // pred_check_branch
          %425 = sbr.rel (%p423) target = $region32
        $region31: #{tpu_custom_call.1} parent=11 // pred_region
          _
        $region32: #{tpu_custom_call.1} parent=11 // pred_fallthru
          _
        // Predicated region
        $region33: #{tpu_custom_call.1} parent=11 // pred_check
          %p426 = pneg %p286
        $region34: #{tpu_custom_call.1} parent=11 // pred_check_branch
          %428 = sbr.rel (%p426) target = $region36
        $region35: #{tpu_custom_call.1} parent=11 // pred_region
          _
        $region36: #{tpu_custom_call.1} parent=11 // pred_fallthru
          _
        // Predicated region
        $region37: #{tpu_custom_call.1} parent=11 // pred_check
          %p429 = pneg %p307
        $region38: #{tpu_custom_call.1} parent=11 // pred_check_branch
          %431 = sbr.rel (%p429) target = $region40
        $region39: #{tpu_custom_call.1} parent=11 // pred_region
          _
        $region40: #{tpu_custom_call.1} parent=11 // pred_fallthru
          _
        // Predicated region
        $region41: #{tpu_custom_call.1} parent=11 // pred_check
          %p432 = pneg %p328
        $region42: #{tpu_custom_call.1} parent=11 // pred_check_branch
          %434 = sbr.rel (%p432) target = $region44
        $region43: #{tpu_custom_call.1} parent=11 // pred_region
          _
        $region44: #{tpu_custom_call.1} parent=11 // pred_fallthru
          _
        // Predicated region
        $region45: #{tpu_custom_call.1} parent=11 // pred_check
          %p435 = pneg %p349
        $region46: #{tpu_custom_call.1} parent=11 // pred_check_branch
          %437 = sbr.rel (%p435) target = $region48
        $region47: #{tpu_custom_call.1} parent=11 // pred_region
          _
        $region48: #{tpu_custom_call.1} parent=11 // pred_fallthru
          _
        // Predicated region
        $region49: #{tpu_custom_call.1} parent=11 // pred_check
          %p438 = pneg %p370
        $region50: #{tpu_custom_call.1} parent=11 // pred_check_branch
          %440 = sbr.rel (%p438) target = $region52
        $region51: #{tpu_custom_call.1} parent=11 // pred_region
          _
        $region52: #{tpu_custom_call.1} parent=11 // pred_fallthru
          _
      $region12: #{tpu_custom_call.1} parent=5 // pred_fallthru
        _
      %p441 = scmp.lt.s32.totalorder %s30, 2
      // Predicated region
      $region53: #{tpu_custom_call.1} parent=5 // pred_check
        %p442 = pneg %p441
      $region54: #{tpu_custom_call.1} parent=5 // pred_check_branch
        %444 = sbr.rel (%p442) target = $region56
      $region55: #{tpu_custom_call.1} parent=5 // pred_region
        // Predicated region
        $region57: #{tpu_custom_call.1} parent=55 // pred_check
          %p445 = pneg %p50
        $region58: #{tpu_custom_call.1} parent=55 // pred_check_branch
          %447 = sbr.rel (%p445) target = $region60
        $region59: #{tpu_custom_call.1} parent=55 // pred_region
          %p448 = scmp.lt.s32.totalorder %s30, 1
          %s449 = scalar_select %p448, %s30, 1
          %s450 = smul.addr %s449, 4
          %s451 = scalar_lea.vmem %s0, %s450
        $region60: #{tpu_custom_call.1} parent=55 // pred_fallthru
          _
        // Predicated region
        $region61: #{tpu_custom_call.1} parent=55 // pred_check
          %p452 = pneg %p76
        $region62: #{tpu_custom_call.1} parent=55 // pred_check_branch
          %454 = sbr.rel (%p452) target = $region64
        $region63: #{tpu_custom_call.1} parent=55 // pred_region
          %p455 = scmp.lt.s32.totalorder %s30, 1
          %s456 = scalar_select %p455, %s30, 1
          %s457 = smul.addr %s456, 4
          %s458 = scalar_lea.vmem %s1, %s457
        $region64: #{tpu_custom_call.1} parent=55 // pred_fallthru
          _
        // Predicated region
        $region65: #{tpu_custom_call.1} parent=55 // pred_check
          %p459 = pneg %p102
        $region66: #{tpu_custom_call.1} parent=55 // pred_check_branch
          %461 = sbr.rel (%p459) target = $region68
        $region67: #{tpu_custom_call.1} parent=55 // pred_region
          %s462 = sand.u32 %s92, 1
          %s463 = scalar_lea.sflag [#allocation3], %s462
          %s464 = sand.u32 %s92, 1
          %s465 = smul.addr %s464, 4
          %s466 = scalar_lea.vmem [#allocation2], %s465
          %s468 = ssub.s32 64, 64
          %469 = vsyncadd %s463, %s468
          %s470 = smul.addr %s30, 64
          %s471 = scalar_lea.hbm %s2, %s470
          %s473 = sshll.u32 %s466, 4
          %s474 = int_to_ptr.vmem [resolvable:$true] %s473
          %476 = dma.hbm_to_vmem [thread:$0]  %s471, 64, %s474, %s463
        $region68: #{tpu_custom_call.1} parent=55 // pred_fallthru
          _
        // Predicated region
        $region69: #{tpu_custom_call.1} parent=55 // pred_check
          %p477 = pneg %p128
        $region70: #{tpu_custom_call.1} parent=55 // pred_check_branch
          %479 = sbr.rel (%p477) target = $region72
        $region71: #{tpu_custom_call.1} parent=55 // pred_region
          %s480 = sand.u32 %s118, 1
          %s481 = scalar_lea.sflag [#allocation6], %s480
          %s482 = sand.u32 %s118, 1
          %s483 = smul.addr %s482, 4
          %s484 = scalar_lea.vmem [#allocation5], %s483
          %s486 = ssub.s32 64, 64
          %487 = vsyncadd %s481, %s486
          %s488 = smul.addr %s30, 64
          %s489 = scalar_lea.hbm %s3, %s488
          %s491 = sshll.u32 %s484, 4
          %s492 = int_to_ptr.vmem [resolvable:$true] %s491
          %494 = dma.hbm_to_vmem [thread:$0]  %s489, 64, %s492, %s481
        $region72: #{tpu_custom_call.1} parent=55 // pred_fallthru
          _
        // Predicated region
        $region73: #{tpu_custom_call.1} parent=55 // pred_check
          %p495 = pneg %p154
        $region74: #{tpu_custom_call.1} parent=55 // pred_check_branch
          %497 = sbr.rel (%p495) target = $region76
        $region75: #{tpu_custom_call.1} parent=55 // pred_region
          %p498 = scmp.lt.s32.totalorder %s30, 1
          %s499 = scalar_select %p498, %s30, 1
          %s500 = smul.addr %s499, 8
          %s501 = scalar_lea.vmem %s4, %s500
        $region76: #{tpu_custom_call.1} parent=55 // pred_fallthru
          _
      $region56: #{tpu_custom_call.1} parent=5 // pred_fallthru
        _
      %p502 = scmp.le.s32.totalorder 1, %s30
      %p503 = scmp.lt.s32.totalorder %s30, 3
      %p504 = pnand %p502, %p503
      %p505 = pneg %p504
      // Predicated region
      $region77: #{tpu_custom_call.1} parent=5 // pred_check
        _
      $region78: #{tpu_custom_call.1} parent=5 // pred_check_branch
        %507 = sbr.rel (%p504) target = $region80
      $region79: #{tpu_custom_call.1} parent=5 // pred_region
        %s508 = ssub.s32 %s30, 1
        %s509 = sand.u32 %s95, 1
        %s510 = scalar_lea.sflag [#allocation3], %s509
        %s511 = sand.u32 %s95, 1
        %s512 = smul.addr %s511, 4
        %s513 = scalar_lea.vmem [#allocation2], %s512
        // Predicated region
        $region81: #{tpu_custom_call.1} parent=79 // pred_check
          %p514 = pneg %p108
        $region82: #{tpu_custom_call.1} parent=79 // pred_check_branch
          %516 = sbr.rel (%p514) target = $region84
        $region83: #{tpu_custom_call.1} parent=79 // pred_region
          %517 = dma.done %s510, 64
        $region84: #{tpu_custom_call.1} parent=79 // pred_fallthru
          _
        %s518 = sand.u32 %s121, 1
        %s519 = scalar_lea.sflag [#allocation6], %s518
        %s520 = sand.u32 %s121, 1
        %s521 = smul.addr %s520, 4
        %s522 = scalar_lea.vmem [#allocation5], %s521
        // Predicated region
        $region85: #{tpu_custom_call.1} parent=79 // pred_check
          %p523 = pneg %p134
        $region86: #{tpu_custom_call.1} parent=79 // pred_check_branch
          %525 = sbr.rel (%p523) target = $region88
        $region87: #{tpu_custom_call.1} parent=79 // pred_region
          %526 = dma.done %s519, 64
        $region88: #{tpu_custom_call.1} parent=79 // pred_fallthru
          _
        %p527 = scmp.lt.s32.totalorder %s35, 1
        %s528 = scalar_select %p527, %s35, 1
        %s529 = smul.addr %s528, 4
        %s530 = scalar_lea.vmem %s0, %s529
        %p531 = pneg %p56
        %p532 = pneg %p53
        %p533 = scmp.lt.s32.totalorder %s35, 1
        %s534 = scalar_select %p533, %s35, 1
        %s535 = smul.addr %s534, 4
        %s536 = scalar_lea.vmem %s1, %s535
        %p537 = pneg %p82
        %p538 = pneg %p79
        %s539 = sand.u32 %s95, 1
        %s540 = scalar_lea.sflag [#allocation3], %s539
        %s541 = sand.u32 %s95, 1
        %s542 = smul.addr %s541, 4
        %s543 = scalar_lea.vmem [#allocation2], %s542
        %p544 = pneg %p108
        %p545 = pneg %p105
        %s546 = sand.u32 %s121, 1
        %s547 = scalar_lea.sflag [#allocation6], %s546
        %s548 = sand.u32 %s121, 1
        %s549 = smul.addr %s548, 4
        %s550 = scalar_lea.vmem [#allocation5], %s549
        %p551 = pneg %p134
        %p552 = pneg %p131
        %p553 = scmp.lt.s32.totalorder %s35, 1
        %s554 = scalar_select %p553, %s35, 1
        %s555 = smul.addr %s554, 8
        %s556 = scalar_lea.vmem %s4, %s555
        %p557 = pneg %p160
        %p558 = pneg %p157
        %p559 = pneg %p181
        %p560 = pneg %p178
        %p561 = pneg %p202
        %p562 = pneg %p199
        %p563 = pneg %p223
        %p564 = pneg %p220
        %p565 = pneg %p244
        %p566 = pneg %p241
        %p567 = pneg %p265
        %p568 = pneg %p262
        %p569 = pneg %p286
        %p570 = pneg %p283
        %p571 = pneg %p307
        %p572 = pneg %p304
        %p573 = pneg %p328
        %p574 = pneg %p325
        %p575 = pneg %p349
        %p576 = pneg %p346
        %p577 = pneg %p370
        %p578 = pneg %p367
        %p579 = pneg %p396
        %p580 = pneg %p393
        %s581 = sand.u32 %s383, 1
        %s582 = scalar_lea.sflag [#allocation4], %s581
        %s583 = sand.u32 %s383, 1
        %s584 = scalar_lea.vmem [#allocation7], %s583
        %p585 = scmp.lt.s32.totalorder %s35, 1
        %s586 = scalar_select %p585, %s35, 1
        %s587 = smul.addr %s586, 4
        %s588 = scalar_lea.vmem %s0, %s587
        %p589 = scmp.lt.s32.totalorder %s35, 1
        %s590 = scalar_select %p589, %s35, 1
        %s591 = smul.addr %s590, 4
        %s592 = scalar_lea.vmem %s1, %s591
        %p593 = scmp.lt.s32.totalorder %s35, 1
        %s594 = scalar_select %p593, %s35, 1
        %s595 = smul.addr %s594, 8
        %s596 = scalar_lea.vmem %s4, %s595
        %v598 = vld [vmem:[%s588] sm:$0xf]
        %v599 = vld [vmem:[%s5] sm:$0xf]
        %v600 = vld [vmem:[%s5 + $0x4] sm:$0xf]
        %v601 = vld [vmem:[%s5 + $0x8] sm:$0xf]
        %v602 = vld [vmem:[%s5 + $0xc] sm:$0xf]
        %v603 = vld [vmem:[%s5 + $0x10] sm:$0x1]
        %v609 = vunpack.c.l.b16 %v599
        %v610 = vunpack.c.l.b16 %v600
        %v611 = vunpack.c.l.b16 %v601
        %v612 = vunpack.c.l.b16 %v602
        %v613 = vunpack.c.l.b16 %v603
        %v614 = vpack.c.b16 %v610, %v609
        %v615 = vpack.c.b16 %v612, %v611
        %v616 = vpack.c.b16 %v613, %v613
        %vm619 = vcmask 269312
        %v621 = vsel %vm619, %v598, 0
        %vm623 = vcmask 1040384
        %v624 = vsel 0, 4294967295, 65535
        %v625 = vsel %vm623, %v624, 0
        %v627 = vand.u32 %v616, %v625
        %629 = vmatprep.subr.bf16.mxu0 0
        %630 = vmatpush1.bf16.msra.mxu0 0
        %631 = vmatprep.subr.bf16.mxu0 0
        %632 = vmatpush1.bf16.msra.mxu0 0
        %633 = vmatprep.subr.bf16.mxu0 0
        %634 = vmatpush1.bf16.msra.mxu0 0
        %635 = vmatprep.subr.bf16.mxu0 0
        %636 = vmatpush1.bf16.msra.mxu0 0
        %637 = vmatprep.subr.bf16.mxu0 0
        %638 = vmatpush1.bf16.msra.mxu0 0
        %639 = vmatprep.subr.bf16.mxu0 0
        %640 = vmatpush1.bf16.msra.mxu0 %v627
        %641 = vmatprep.subr.bf16.mxu0 0
        %642 = vmatpush1.bf16.msra.mxu0 %v615
        %643 = vmatprep.subr.bf16.mxu0 0
        %644 = vmatpush1.bf16.msra.mxu0 %v614
        %645 = vmatprep.subr.bf16.mxu0 0
        %646 = vmatpush2.bf16.msra.mxu0 0
        %647 = vmatprep.subr.bf16.mxu0 0
        %648 = vmatpush2.bf16.msra.mxu0 0
        %649 = vmatprep.subr.bf16.mxu0 0
        %650 = vmatpush2.bf16.msra.mxu0 0
        %651 = vmatprep.subr.bf16.mxu0 0
        %652 = vmatpush2.bf16.msra.mxu0 0
        %653 = vmatprep.subr.bf16.mxu0 0
        %654 = vmatpush2.bf16.msra.mxu0 0
        %655 = vmatprep.subr.bf16.mxu0 0
        %656 = vmatpush2.bf16.msra.mxu0 0
        %657 = vmatprep.subr.bf16.mxu0 0
        %658 = vmatpush2.bf16.msra.mxu0 0
        %659 = vmatprep.subr.bf16.mxu0 0
        %660 = vmatpush2.bf16.msra.mxu0 0
        %661 = vmatprep.mubr.bf16.mxu0 0
        %662 = vmatmul.mubr.bf16.gmra.mxu0 %v621
        %v663 = vpop.f32.mrf.mxu0
        %v664 = vadd.f32 0.0, %v663
        %v665 = vpop.f32.mrf.mxu0
        %v666 = vpop.f32.mrf.mxu0
        %v667 = vpop.f32.mrf.mxu0
        %668 = vdwg.mxu0
        %v669 = vld [vmem:[%s592] sm:$0xf]
        %v671 = vsel %vm619, %v669, 0
        %673 = vmatprep.subr.bf16.mxu0 0
        %674 = vmatpush1.bf16.msra.mxu0 0
        %675 = vmatprep.subr.bf16.mxu0 0
        %676 = vmatpush1.bf16.msra.mxu0 0
        %677 = vmatprep.subr.bf16.mxu0 0
        %678 = vmatpush1.bf16.msra.mxu0 0
        %679 = vmatprep.subr.bf16.mxu0 0
        %680 = vmatpush1.bf16.msra.mxu0 0
        %681 = vmatprep.subr.bf16.mxu0 0
        %682 = vmatpush1.bf16.msra.mxu0 0
        %683 = vmatprep.subr.bf16.mxu0 0
        %684 = vmatpush1.bf16.msra.mxu0 %v627
        %685 = vmatprep.subr.bf16.mxu0 0
        %686 = vmatpush1.bf16.msra.mxu0 %v615
        %687 = vmatprep.subr.bf16.mxu0 0
        %688 = vmatpush1.bf16.msra.mxu0 %v614
        %689 = vmatprep.subr.bf16.mxu0 0
        %690 = vmatpush2.bf16.msra.mxu0 0
        %691 = vmatprep.subr.bf16.mxu0 0
        %692 = vmatpush2.bf16.msra.mxu0 0
        %693 = vmatprep.subr.bf16.mxu0 0
        %694 = vmatpush2.bf16.msra.mxu0 0
        %695 = vmatprep.subr.bf16.mxu0 0
        %696 = vmatpush2.bf16.msra.mxu0 0
        %697 = vmatprep.subr.bf16.mxu0 0
        %698 = vmatpush2.bf16.msra.mxu0 0
        %699 = vmatprep.subr.bf16.mxu0 0
        %700 = vmatpush2.bf16.msra.mxu0 0
        %701 = vmatprep.subr.bf16.mxu0 0
        %702 = vmatpush2.bf16.msra.mxu0 0
        %703 = vmatprep.subr.bf16.mxu0 0
        %704 = vmatpush2.bf16.msra.mxu0 0
        %705 = vmatprep.mubr.bf16.mxu0 0
        %706 = vmatmul.mubr.bf16.gmra.mxu0 %v671
        %v707 = vpop.f32.mrf.mxu0
        %v708 = vadd.f32 0.0, %v707
        %v709 = vpop.f32.mrf.mxu0
        %v710 = vpop.f32.mrf.mxu0
        %v711 = vpop.f32.mrf.mxu0
        %712 = vdwg.mxu0
        %v713 = vld [vmem:[%s6] sm:$0xf]
        %v714 = vld [vmem:[%s6 + $0x4] sm:$0xf]
        %v715 = vld [vmem:[%s6 + $0x8] sm:$0xf]
        %v716 = vld [vmem:[%s6 + $0xc] sm:$0xf]
        %v717 = vpack.c.bf16 %v664, %v664
        %v722 = vunpack.c.l.b16 %v713
        %v723 = vunpack.c.l.b16 %v714
        %v724 = vunpack.c.l.b16 %v715
        %v725 = vunpack.c.l.b16 %v716
        %v726 = vpack.c.b16 %v723, %v722
        %v727 = vpack.c.b16 %v725, %v724
        %vm730 = vcmask 261120
        %v732 = vsel %vm730, %v717, 0
        %734 = vmatprep.subr.bf16.mxu0 0
        %735 = vmatpush1.bf16.msra.mxu0 0
        %736 = vmatprep.subr.bf16.mxu0 0
        %737 = vmatpush1.bf16.msra.mxu0 0
        %738 = vmatprep.subr.bf16.mxu0 0
        %739 = vmatpush1.bf16.msra.mxu0 0
        %740 = vmatprep.subr.bf16.mxu0 0
        %741 = vmatpush1.bf16.msra.mxu0 0
        %742 = vmatprep.subr.bf16.mxu0 0
        %743 = vmatpush1.bf16.msra.mxu0 0
        %744 = vmatprep.subr.bf16.mxu0 0
        %745 = vmatpush1.bf16.msra.mxu0 0
        %746 = vmatprep.subr.bf16.mxu0 0
        %747 = vmatpush1.bf16.msra.mxu0 %v727
        %748 = vmatprep.subr.bf16.mxu0 0
        %749 = vmatpush1.bf16.msra.mxu0 %v726
        %750 = vmatprep.subr.bf16.mxu0 0
        %751 = vmatpush2.bf16.msra.mxu0 0
        %752 = vmatprep.subr.bf16.mxu0 0
        %753 = vmatpush2.bf16.msra.mxu0 0
        %754 = vmatprep.subr.bf16.mxu0 0
        %755 = vmatpush2.bf16.msra.mxu0 0
        %756 = vmatprep.subr.bf16.mxu0 0
        %757 = vmatpush2.bf16.msra.mxu0 0
        %758 = vmatprep.subr.bf16.mxu0 0
        %759 = vmatpush2.bf16.msra.mxu0 0
        %760 = vmatprep.subr.bf16.mxu0 0
        %761 = vmatpush2.bf16.msra.mxu0 0
        %762 = vmatprep.subr.bf16.mxu0 0
        %763 = vmatpush2.bf16.msra.mxu0 0
        %764 = vmatprep.subr.bf16.mxu0 0
        %765 = vmatpush2.bf16.msra.mxu0 0
        %766 = vmatprep.mubr.bf16.mxu0 0
        %767 = vmatmul.mubr.bf16.gmra.mxu0 %v732
        %v768 = vpop.f32.mrf.mxu0
        %v769 = vadd.f32 0.0, %v768
        %v770 = vpop.f32.mrf.mxu0
        %v771 = vpop.f32.mrf.mxu0
        %v772 = vpop.f32.mrf.mxu0
        %773 = vdwg.mxu0
        %v774 = vld [vmem:[%s7] sm:$0xf]
        %v775 = vld [vmem:[%s7 + $0x4] sm:$0xf]
        %v776 = vld [vmem:[%s7 + $0x8] sm:$0xf]
        %v777 = vld [vmem:[%s7 + $0xc] sm:$0xf]
        %v778 = vpack.c.bf16 %v708, %v708
        %v783 = vunpack.c.l.b16 %v774
        %v784 = vunpack.c.l.b16 %v775
        %v785 = vunpack.c.l.b16 %v776
        %v786 = vunpack.c.l.b16 %v777
        %v787 = vpack.c.b16 %v784, %v783
        %v788 = vpack.c.b16 %v786, %v785
        %v792 = vsel %vm730, %v778, 0
        %794 = vmatprep.subr.bf16.mxu0 0
        %795 = vmatpush1.bf16.msra.mxu0 0
        %796 = vmatprep.subr.bf16.mxu0 0
        %797 = vmatpush1.bf16.msra.mxu0 0
        %798 = vmatprep.subr.bf16.mxu0 0
        %799 = vmatpush1.bf16.msra.mxu0 0
        %800 = vmatprep.subr.bf16.mxu0 0
        %801 = vmatpush1.bf16.msra.mxu0 0
        %802 = vmatprep.subr.bf16.mxu0 0
        %803 = vmatpush1.bf16.msra.mxu0 0
        %804 = vmatprep.subr.bf16.mxu0 0
        %805 = vmatpush1.bf16.msra.mxu0 0
        %806 = vmatprep.subr.bf16.mxu0 0
        %807 = vmatpush1.bf16.msra.mxu0 %v788
        %808 = vmatprep.subr.bf16.mxu0 0
        %809 = vmatpush1.bf16.msra.mxu0 %v787
        %810 = vmatprep.subr.bf16.mxu0 0
        %811 = vmatpush2.bf16.msra.mxu0 0
        %812 = vmatprep.subr.bf16.mxu0 0
        %813 = vmatpush2.bf16.msra.mxu0 0
        %814 = vmatprep.subr.bf16.mxu0 0
        %815 = vmatpush2.bf16.msra.mxu0 0
        %816 = vmatprep.subr.bf16.mxu0 0
        %817 = vmatpush2.bf16.msra.mxu0 0
        %818 = vmatprep.subr.bf16.mxu0 0
        %819 = vmatpush2.bf16.msra.mxu0 0
        %820 = vmatprep.subr.bf16.mxu0 0
        %821 = vmatpush2.bf16.msra.mxu0 0
        %822 = vmatprep.subr.bf16.mxu0 0
        %823 = vmatpush2.bf16.msra.mxu0 0
        %824 = vmatprep.subr.bf16.mxu0 0
        %825 = vmatpush2.bf16.msra.mxu0 0
        %826 = vmatprep.mubr.bf16.mxu0 0
        %827 = vmatmul.mubr.bf16.gmra.mxu0 %v792
        %v828 = vpop.f32.mrf.mxu0
        %v829 = vadd.f32 0.0, %v828
        %v830 = vpop.f32.mrf.mxu0
        %v831 = vpop.f32.mrf.mxu0
        %v832 = vpop.f32.mrf.mxu0
        %833 = vdwg.mxu0
        %v834 = vadd.f32 %v769, %v829
        %v835 = vld [vmem:[%s10] sm:$0x1]
        %v837 = vlaneseq
        %v838 = vshrl.u32 %v837, 7
        %v839 = vsub.s32 0, %v838
        %v840 = vrot.slane %v835, %v839
        %v842 = vadd.f32 %v834, %v840
        %v843 = vld [vmem:[%s513] sm:$0xf]
        %v844 = vld [vmem:[%s522] sm:$0xf]
        %vm845 = vcmask 64512
        %v847 = vsel %vm845, %v843, 0
        %vm849 = vcmask 1043456
        %v851 = vsel %vm849, 0, 0
        %853 = vmatprep.subr.bf16.mxu0 0
        %854 = vmatpush1.bf16.msra.mxu0 0
        %855 = vmatprep.subr.bf16.mxu0 0
        %856 = vmatpush1.bf16.msra.mxu0 0
        %857 = vmatprep.subr.bf16.mxu0 0
        %858 = vmatpush1.bf16.msra.mxu0 0
        %859 = vmatprep.subr.bf16.mxu0 0
        %860 = vmatpush1.bf16.msra.mxu0 0
        %861 = vmatprep.subr.bf16.mxu0 0
        %862 = vmatpush1.bf16.msra.mxu0 0
        %863 = vmatprep.subr.bf16.mxu0 0
        %864 = vmatpush1.bf16.msra.mxu0 0
        %865 = vmatprep.subr.bf16.mxu0 0
        %866 = vmatpush1.bf16.msra.mxu0 0
        %867 = vmatprep.subr.bf16.mxu0 0
        %868 = vmatpush1.bf16.msra.mxu0 %v851
        %869 = vmatprep.subr.bf16.mxu0 0
        %870 = vmatpush2.bf16.msra.mxu0 0
        %871 = vmatprep.subr.bf16.mxu0 0
        %872 = vmatpush2.bf16.msra.mxu0 0
        %873 = vmatprep.subr.bf16.mxu0 0
        %874 = vmatpush2.bf16.msra.mxu0 0
        %875 = vmatprep.subr.bf16.mxu0 0
        %876 = vmatpush2.bf16.msra.mxu0 0
        %877 = vmatprep.subr.bf16.mxu0 0
        %878 = vmatpush2.bf16.msra.mxu0 0
        %879 = vmatprep.subr.bf16.mxu0 0
        %880 = vmatpush2.bf16.msra.mxu0 0
        %881 = vmatprep.subr.bf16.mxu0 0
        %882 = vmatpush2.bf16.msra.mxu0 0
        %883 = vmatprep.subr.bf16.mxu0 0
        %884 = vmatpush2.bf16.msra.mxu0 0
        %885 = vmatprep.mubr.bf16.mxu0 0
        %886 = vmatmul.mubr.bf16.gmra.mxu0 %v847
        %v887 = vpop.f32.mrf.mxu0
        %v888 = vadd.f32 0.0, %v887
        %v889 = vpop.f32.mrf.mxu0
        %v890 = vpop.f32.mrf.mxu0
        %v891 = vpop.f32.mrf.mxu0
        %892 = vdwg.mxu0
        %v894 = vsel %vm845, %v844, 0
        %896 = vmatprep.subr.bf16.mxu0 0
        %897 = vmatpush1.bf16.msra.mxu0 0
        %898 = vmatprep.subr.bf16.mxu0 0
        %899 = vmatpush1.bf16.msra.mxu0 0
        %900 = vmatprep.subr.bf16.mxu0 0
        %901 = vmatpush1.bf16.msra.mxu0 0
        %902 = vmatprep.subr.bf16.mxu0 0
        %903 = vmatpush1.bf16.msra.mxu0 0
        %904 = vmatprep.subr.bf16.mxu0 0
        %905 = vmatpush1.bf16.msra.mxu0 0
        %906 = vmatprep.subr.bf16.mxu0 0
        %907 = vmatpush1.bf16.msra.mxu0 0
        %908 = vmatprep.subr.bf16.mxu0 0
        %909 = vmatpush1.bf16.msra.mxu0 0
        %910 = vmatprep.subr.bf16.mxu0 0
        %911 = vmatpush1.bf16.msra.mxu0 %v851
        %912 = vmatprep.subr.bf16.mxu0 0
        %913 = vmatpush2.bf16.msra.mxu0 0
        %914 = vmatprep.subr.bf16.mxu0 0
        %915 = vmatpush2.bf16.msra.mxu0 0
        %916 = vmatprep.subr.bf16.mxu0 0
        %917 = vmatpush2.bf16.msra.mxu0 0
        %918 = vmatprep.subr.bf16.mxu0 0
        %919 = vmatpush2.bf16.msra.mxu0 0
        %920 = vmatprep.subr.bf16.mxu0 0
        %921 = vmatpush2.bf16.msra.mxu0 0
        %922 = vmatprep.subr.bf16.mxu0 0
        %923 = vmatpush2.bf16.msra.mxu0 0
        %924 = vmatprep.subr.bf16.mxu0 0
        %925 = vmatpush2.bf16.msra.mxu0 0
        %926 = vmatprep.subr.bf16.mxu0 0
        %927 = vmatpush2.bf16.msra.mxu0 0
        %928 = vmatprep.mubr.bf16.mxu0 0
        %929 = vmatmul.mubr.bf16.gmra.mxu0 %v894
        %v930 = vpop.f32.mrf.mxu0
        %v931 = vadd.f32 0.0, %v930
        %v932 = vpop.f32.mrf.mxu0
        %v933 = vpop.f32.mrf.mxu0
        %v934 = vpop.f32.mrf.mxu0
        %935 = vdwg.mxu0
        %v936 = vld [vmem:[%s8] sm:$0xf]
        %v937 = vld [vmem:[%s8 + $0x4] sm:$0xf]
        %v938 = vld [vmem:[%s8 + $0x8] sm:$0xf]
        %v939 = vld [vmem:[%s8 + $0xc] sm:$0xf]
        %v940 = vpack.c.bf16 %v888, %v888
        %v945 = vunpack.c.l.b16 %v936
        %v946 = vunpack.c.l.b16 %v937
        %v947 = vunpack.c.l.b16 %v938
        %v948 = vunpack.c.l.b16 %v939
        %v949 = vpack.c.b16 %v946, %v945
        %v950 = vpack.c.b16 %v948, %v947
        %v954 = vsel %vm730, %v940, 0
        %956 = vmatprep.subr.bf16.mxu0 0
        %957 = vmatpush1.bf16.msra.mxu0 0
        %958 = vmatprep.subr.bf16.mxu0 0
        %959 = vmatpush1.bf16.msra.mxu0 0
        %960 = vmatprep.subr.bf16.mxu0 0
        %961 = vmatpush1.bf16.msra.mxu0 0
        %962 = vmatprep.subr.bf16.mxu0 0
        %963 = vmatpush1.bf16.msra.mxu0 0
        %964 = vmatprep.subr.bf16.mxu0 0
        %965 = vmatpush1.bf16.msra.mxu0 0
        %966 = vmatprep.subr.bf16.mxu0 0
        %967 = vmatpush1.bf16.msra.mxu0 0
        %968 = vmatprep.subr.bf16.mxu0 0
        %969 = vmatpush1.bf16.msra.mxu0 %v950
        %970 = vmatprep.subr.bf16.mxu0 0
        %971 = vmatpush1.bf16.msra.mxu0 %v949
        %972 = vmatprep.subr.bf16.mxu0 0
        %973 = vmatpush2.bf16.msra.mxu0 0
        %974 = vmatprep.subr.bf16.mxu0 0
        %975 = vmatpush2.bf16.msra.mxu0 0
        %976 = vmatprep.subr.bf16.mxu0 0
        %977 = vmatpush2.bf16.msra.mxu0 0
        %978 = vmatprep.subr.bf16.mxu0 0
        %979 = vmatpush2.bf16.msra.mxu0 0
        %980 = vmatprep.subr.bf16.mxu0 0
        %981 = vmatpush2.bf16.msra.mxu0 0
        %982 = vmatprep.subr.bf16.mxu0 0
        %983 = vmatpush2.bf16.msra.mxu0 0
        %984 = vmatprep.subr.bf16.mxu0 0
        %985 = vmatpush2.bf16.msra.mxu0 0
        %986 = vmatprep.subr.bf16.mxu0 0
        %987 = vmatpush2.bf16.msra.mxu0 0
        %988 = vmatprep.mubr.bf16.mxu0 0
        %989 = vmatmul.mubr.bf16.gmra.mxu0 %v954
        %v990 = vpop.f32.mrf.mxu0
        %v991 = vadd.f32 0.0, %v990
        %v992 = vpop.f32.mrf.mxu0
        %v993 = vpop.f32.mrf.mxu0
        %v994 = vpop.f32.mrf.mxu0
        %995 = vdwg.mxu0
        %v996 = vadd.f32 %v842, %v991
        %v997 = vld [vmem:[%s9] sm:$0xf]
        %v998 = vld [vmem:[%s9 + $0x4] sm:$0xf]
        %v999 = vld [vmem:[%s9 + $0x8] sm:$0xf]
        %v1000 = vld [vmem:[%s9 + $0xc] sm:$0xf]
        %v1001 = vpack.c.bf16 %v931, %v931
        %v1006 = vunpack.c.l.b16 %v997
        %v1007 = vunpack.c.l.b16 %v998
        %v1008 = vunpack.c.l.b16 %v999
        %v1009 = vunpack.c.l.b16 %v1000
        %v1010 = vpack.c.b16 %v1007, %v1006
        %v1011 = vpack.c.b16 %v1009, %v1008
        %v1015 = vsel %vm730, %v1001, 0
        %1017 = vmatprep.subr.bf16.mxu0 0
        %1018 = vmatpush1.bf16.msra.mxu0 0
        %1019 = vmatprep.subr.bf16.mxu0 0
        %1020 = vmatpush1.bf16.msra.mxu0 0
        %1021 = vmatprep.subr.bf16.mxu0 0
        %1022 = vmatpush1.bf16.msra.mxu0 0
        %1023 = vmatprep.subr.bf16.mxu0 0
        %1024 = vmatpush1.bf16.msra.mxu0 0
        %1025 = vmatprep.subr.bf16.mxu0 0
        %1026 = vmatpush1.bf16.msra.mxu0 0
        %1027 = vmatprep.subr.bf16.mxu0 0
        %1028 = vmatpush1.bf16.msra.mxu0 0
        %1029 = vmatprep.subr.bf16.mxu0 0
        %1030 = vmatpush1.bf16.msra.mxu0 %v1011
        %1031 = vmatprep.subr.bf16.mxu0 0
        %1032 = vmatpush1.bf16.msra.mxu0 %v1010
        %1033 = vmatprep.subr.bf16.mxu0 0
        %1034 = vmatpush2.bf16.msra.mxu0 0
        %1035 = vmatprep.subr.bf16.mxu0 0
        %1036 = vmatpush2.bf16.msra.mxu0 0
        %1037 = vmatprep.subr.bf16.mxu0 0
        %1038 = vmatpush2.bf16.msra.mxu0 0
        %1039 = vmatprep.subr.bf16.mxu0 0
        %1040 = vmatpush2.bf16.msra.mxu0 0
        %1041 = vmatprep.subr.bf16.mxu0 0
        %1042 = vmatpush2.bf16.msra.mxu0 0
        %1043 = vmatprep.subr.bf16.mxu0 0
        %1044 = vmatpush2.bf16.msra.mxu0 0
        %1045 = vmatprep.subr.bf16.mxu0 0
        %1046 = vmatpush2.bf16.msra.mxu0 0
        %1047 = vmatprep.subr.bf16.mxu0 0
        %1048 = vmatpush2.bf16.msra.mxu0 0
        %1049 = vmatprep.mubr.bf16.mxu0 0
        %1050 = vmatmul.mubr.bf16.gmra.mxu0 %v1015
        %v1051 = vpop.f32.mrf.mxu0
        %v1052 = vadd.f32 0.0, %v1051
        %v1053 = vpop.f32.mrf.mxu0
        %v1054 = vpop.f32.mrf.mxu0
        %v1055 = vpop.f32.mrf.mxu0
        %1056 = vdwg.mxu0
        %v1057 = vadd.f32 %v996, %v1052
        %v1058 = vxor.u32 %v1057, 2147483648
        %v1059 = vmul.f32 %v1058, 1.442695
        %v1060 = vpow.pop %v1059
        %v1061 = vadd.f32 %v1060, 1.0
        %v1062 = vrcp.pop %v1061
        %v1063 = vmul.f32 1.0, %v1062
        %v1064 = vmul.f32 %v1063, 0.0
        %1066 = vrot.lane.b32.xlu0 %v1063, 32
        %v1067 = vpop.permute.xlu0 %1066
        %v1069 = vmul.f32 %v1063, %v1067
        %1071 = vrot.lane.b32.xlu0 %v1069, 64
        %v1072 = vpop.permute.xlu0 %1071
        %v1074 = vadd.f32 %v1064, %v1072
        %v1075 = vtanh.pop %v1074
        %1077 = vrot.lane.b32.xlu0 %v1075, 96
        %v1078 = vpop.permute.xlu0 %1077
        %v1080 = vmul.f32 %v1063, %v1078
        %v1081 = vpack.c.bf16 %v1080, %v1080
        %1083 = vrot.lane.b32.xlu0 %v1081, 96
        %v1084 = vpop.permute.xlu0 %1083
        %v1086 = vsel %vm849, %v1084, 0
        %1088 = vmatprep.subr.bf16.mxu0 0
        %1089 = vmatpush1.bf16.msra.mxu0 0
        %1090 = vmatprep.subr.bf16.mxu0 0
        %1091 = vmatpush1.bf16.msra.mxu0 0
        %1092 = vmatprep.subr.bf16.mxu0 0
        %1093 = vmatpush1.bf16.msra.mxu0 0
        %1094 = vmatprep.subr.bf16.mxu0 0
        %1095 = vmatpush1.bf16.msra.mxu0 0
        %1096 = vmatprep.subr.bf16.mxu0 0
        %1097 = vmatpush1.bf16.msra.mxu0 0
        %1098 = vmatprep.subr.bf16.mxu0 0
        %1099 = vmatpush1.bf16.msra.mxu0 0
        %1100 = vmatprep.subr.bf16.mxu0 0
        %1101 = vmatpush1.bf16.msra.mxu0 0
        %1102 = vmatprep.subr.bf16.mxu0 0
        %1103 = vmatpush1.bf16.msra.mxu0 %v1086
        %1104 = vmatprep.subr.bf16.mxu0 0
        %1105 = vmatpush2.bf16.msra.mxu0 0
        %1106 = vmatprep.subr.bf16.mxu0 0
        %1107 = vmatpush2.bf16.msra.mxu0 0
        %1108 = vmatprep.subr.bf16.mxu0 0
        %1109 = vmatpush2.bf16.msra.mxu0 0
        %1110 = vmatprep.subr.bf16.mxu0 0
        %1111 = vmatpush2.bf16.msra.mxu0 0
        %1112 = vmatprep.subr.bf16.mxu0 0
        %1113 = vmatpush2.bf16.msra.mxu0 0
        %1114 = vmatprep.subr.bf16.mxu0 0
        %1115 = vmatpush2.bf16.msra.mxu0 0
        %1116 = vmatprep.subr.bf16.mxu0 0
        %1117 = vmatpush2.bf16.msra.mxu0 0
        %1118 = vmatprep.subr.bf16.mxu0 0
        %1119 = vmatpush2.bf16.msra.mxu0 0
        %1120 = vmatprep.mubr.bf16.mxu0 0
        %1121 = vmatmul.mubr.bf16.gmra.mxu0 %v847
        %v1122 = vpop.f32.mrf.mxu0
        %v1123 = vadd.f32 0.0, %v1122
        %v1124 = vpop.f32.mrf.mxu0
        %v1125 = vpop.f32.mrf.mxu0
        %v1126 = vpop.f32.mrf.mxu0
        %1127 = vdwg.mxu0
        %1128 = vmatprep.subr.bf16.mxu0 0
        %1129 = vmatpush1.bf16.msra.mxu0 0
        %1130 = vmatprep.subr.bf16.mxu0 0
        %1131 = vmatpush1.bf16.msra.mxu0 0
        %1132 = vmatprep.subr.bf16.mxu0 0
        %1133 = vmatpush1.bf16.msra.mxu0 0
        %1134 = vmatprep.subr.bf16.mxu0 0
        %1135 = vmatpush1.bf16.msra.mxu0 0
        %1136 = vmatprep.subr.bf16.mxu0 0
        %1137 = vmatpush1.bf16.msra.mxu0 0
        %1138 = vmatprep.subr.bf16.mxu0 0
        %1139 = vmatpush1.bf16.msra.mxu0 0
        %1140 = vmatprep.subr.bf16.mxu0 0
        %1141 = vmatpush1.bf16.msra.mxu0 0
        %1142 = vmatprep.subr.bf16.mxu0 0
        %1143 = vmatpush1.bf16.msra.mxu0 %v1086
        %1144 = vmatprep.subr.bf16.mxu0 0
        %1145 = vmatpush2.bf16.msra.mxu0 0
        %1146 = vmatprep.subr.bf16.mxu0 0
        %1147 = vmatpush2.bf16.msra.mxu0 0
        %1148 = vmatprep.subr.bf16.mxu0 0
        %1149 = vmatpush2.bf16.msra.mxu0 0
        %1150 = vmatprep.subr.bf16.mxu0 0
        %1151 = vmatpush2.bf16.msra.mxu0 0
        %1152 = vmatprep.subr.bf16.mxu0 0
        %1153 = vmatpush2.bf16.msra.mxu0 0
        %1154 = vmatprep.subr.bf16.mxu0 0
        %1155 = vmatpush2.bf16.msra.mxu0 0
        %1156 = vmatprep.subr.bf16.mxu0 0
        %1157 = vmatpush2.bf16.msra.mxu0 0
        %1158 = vmatprep.subr.bf16.mxu0 0
        %1159 = vmatpush2.bf16.msra.mxu0 0
        %1160 = vmatprep.mubr.bf16.mxu0 0
        %1161 = vmatmul.mubr.bf16.gmra.mxu0 %v894
        %v1162 = vpop.f32.mrf.mxu0
        %v1163 = vadd.f32 0.0, %v1162
        %v1164 = vpop.f32.mrf.mxu0
        %v1165 = vpop.f32.mrf.mxu0
        %v1166 = vpop.f32.mrf.mxu0
        %1167 = vdwg.mxu0
        %v1168 = vld [vmem:[%s8] sm:$0xf]
        %v1169 = vld [vmem:[%s8 + $0x4] sm:$0xf]
        %v1170 = vld [vmem:[%s8 + $0x8] sm:$0xf]
        %v1171 = vld [vmem:[%s8 + $0xc] sm:$0xf]
        %v1172 = vpack.c.bf16 %v1123, %v1123
        %v1177 = vunpack.c.l.b16 %v1168
        %v1178 = vunpack.c.l.b16 %v1169
        %v1179 = vunpack.c.l.b16 %v1170
        %v1180 = vunpack.c.l.b16 %v1171
        %v1181 = vpack.c.b16 %v1178, %v1177
        %v1182 = vpack.c.b16 %v1180, %v1179
        %v1186 = vsel %vm730, %v1172, 0
        %1188 = vmatprep.subr.bf16.mxu0 0
        %1189 = vmatpush1.bf16.msra.mxu0 0
        %1190 = vmatprep.subr.bf16.mxu0 0
        %1191 = vmatpush1.bf16.msra.mxu0 0
        %1192 = vmatprep.subr.bf16.mxu0 0
        %1193 = vmatpush1.bf16.msra.mxu0 0
        %1194 = vmatprep.subr.bf16.mxu0 0
        %1195 = vmatpush1.bf16.msra.mxu0 0
        %1196 = vmatprep.subr.bf16.mxu0 0
        %1197 = vmatpush1.bf16.msra.mxu0 0
        %1198 = vmatprep.subr.bf16.mxu0 0
        %1199 = vmatpush1.bf16.msra.mxu0 0
        %1200 = vmatprep.subr.bf16.mxu0 0
        %1201 = vmatpush1.bf16.msra.mxu0 %v1182
        %1202 = vmatprep.subr.bf16.mxu0 0
        %1203 = vmatpush1.bf16.msra.mxu0 %v1181
        %1204 = vmatprep.subr.bf16.mxu0 0
        %1205 = vmatpush2.bf16.msra.mxu0 0
        %1206 = vmatprep.subr.bf16.mxu0 0
        %1207 = vmatpush2.bf16.msra.mxu0 0
        %1208 = vmatprep.subr.bf16.mxu0 0
        %1209 = vmatpush2.bf16.msra.mxu0 0
        %1210 = vmatprep.subr.bf16.mxu0 0
        %1211 = vmatpush2.bf16.msra.mxu0 0
        %1212 = vmatprep.subr.bf16.mxu0 0
        %1213 = vmatpush2.bf16.msra.mxu0 0
        %1214 = vmatprep.subr.bf16.mxu0 0
        %1215 = vmatpush2.bf16.msra.mxu0 0
        %1216 = vmatprep.subr.bf16.mxu0 0
        %1217 = vmatpush2.bf16.msra.mxu0 0
        %1218 = vmatprep.subr.bf16.mxu0 0
        %1219 = vmatpush2.bf16.msra.mxu0 0
        %1220 = vmatprep.mubr.bf16.mxu0 0
        %1221 = vmatmul.mubr.bf16.gmra.mxu0 %v1186
        %v1222 = vpop.f32.mrf.mxu0
        %v1223 = vadd.f32 0.0, %v1222
        %v1224 = vpop.f32.mrf.mxu0
        %v1225 = vpop.f32.mrf.mxu0
        %v1226 = vpop.f32.mrf.mxu0
        %1227 = vdwg.mxu0
        %v1228 = vadd.f32 %v842, %v1223
        %v1229 = vld [vmem:[%s9] sm:$0xf]
        %v1230 = vld [vmem:[%s9 + $0x4] sm:$0xf]
        %v1231 = vld [vmem:[%s9 + $0x8] sm:$0xf]
        %v1232 = vld [vmem:[%s9 + $0xc] sm:$0xf]
        %v1233 = vpack.c.bf16 %v1163, %v1163
        %v1238 = vunpack.c.l.b16 %v1229
        %v1239 = vunpack.c.l.b16 %v1230
        %v1240 = vunpack.c.l.b16 %v1231
        %v1241 = vunpack.c.l.b16 %v1232
        %v1242 = vpack.c.b16 %v1239, %v1238
        %v1243 = vpack.c.b16 %v1241, %v1240
        %v1247 = vsel %vm730, %v1233, 0
        %1249 = vmatprep.subr.bf16.mxu0 0
        %1250 = vmatpush1.bf16.msra.mxu0 0
        %1251 = vmatprep.subr.bf16.mxu0 0
        %1252 = vmatpush1.bf16.msra.mxu0 0
        %1253 = vmatprep.subr.bf16.mxu0 0
        %1254 = vmatpush1.bf16.msra.mxu0 0
        %1255 = vmatprep.subr.bf16.mxu0 0
        %1256 = vmatpush1.bf16.msra.mxu0 0
        %1257 = vmatprep.subr.bf16.mxu0 0
        %1258 = vmatpush1.bf16.msra.mxu0 0
        %1259 = vmatprep.subr.bf16.mxu0 0
        %1260 = vmatpush1.bf16.msra.mxu0 0
        %1261 = vmatprep.subr.bf16.mxu0 0
        %1262 = vmatpush1.bf16.msra.mxu0 %v1243
        %1263 = vmatprep.subr.bf16.mxu0 0
        %1264 = vmatpush1.bf16.msra.mxu0 %v1242
        %1265 = vmatprep.subr.bf16.mxu0 0
        %1266 = vmatpush2.bf16.msra.mxu0 0
        %1267 = vmatprep.subr.bf16.mxu0 0
        %1268 = vmatpush2.bf16.msra.mxu0 0
        %1269 = vmatprep.subr.bf16.mxu0 0
        %1270 = vmatpush2.bf16.msra.mxu0 0
        %1271 = vmatprep.subr.bf16.mxu0 0
        %1272 = vmatpush2.bf16.msra.mxu0 0
        %1273 = vmatprep.subr.bf16.mxu0 0
        %1274 = vmatpush2.bf16.msra.mxu0 0
        %1275 = vmatprep.subr.bf16.mxu0 0
        %1276 = vmatpush2.bf16.msra.mxu0 0
        %1277 = vmatprep.subr.bf16.mxu0 0
        %1278 = vmatpush2.bf16.msra.mxu0 0
        %1279 = vmatprep.subr.bf16.mxu0 0
        %1280 = vmatpush2.bf16.msra.mxu0 0
        %1281 = vmatprep.mubr.bf16.mxu0 0
        %1282 = vmatmul.mubr.bf16.gmra.mxu0 %v1247
        %v1283 = vpop.f32.mrf.mxu0
        %v1284 = vadd.f32 0.0, %v1283
        %v1285 = vpop.f32.mrf.mxu0
        %v1286 = vpop.f32.mrf.mxu0
        %v1287 = vpop.f32.mrf.mxu0
        %1288 = vdwg.mxu0
        %v1289 = vadd.f32 %v1228, %v1284
        %v1290 = vxor.u32 %v1289, 2147483648
        %v1291 = vmul.f32 %v1290, 1.442695
        %v1292 = vpow.pop %v1291
        %v1293 = vadd.f32 %v1292, 1.0
        %v1294 = vrcp.pop %v1293
        %v1295 = vmul.f32 1.0, %v1294
        %v1296 = vmul.f32 %v1295, %v1074
        %1298 = vrot.lane.b32.xlu0 %v1295, 32
        %v1299 = vpop.permute.xlu0 %1298
        %v1301 = vmul.f32 %v1295, %v1299
        %1303 = vrot.lane.b32.xlu0 %v1301, 64
        %v1304 = vpop.permute.xlu0 %1303
        %v1306 = vadd.f32 %v1296, %v1304
        %v1307 = vtanh.pop %v1306
        %1309 = vrot.lane.b32.xlu0 %v1307, 96
        %v1310 = vpop.permute.xlu0 %1309
        %v1312 = vmul.f32 %v1295, %v1310
        %v1313 = vld [vmem:[%s596] sm:$0xff]
        %vm1314 = vcmp.gt.s32.totalorder %v1313, 0
        %v1315 = vsel %vm1314, 1, 0
        %1316 = vset.pattern.permute.xlu0 0
        %1317 = vperm.xlu0 %1316, %v1315
        %v1318 = vpop.permute.xlu0 %1317
        %vm1319 = vcmp.eq.s32.totalorder %v1318, 1
        %v1320 = vsel %vm1319, -1e+12, %v1312
        %vm1321 = vcmask 523520
        %v1322 = vsel %vm1321, %v1320, -inf
        %v1323 = vrot.slane %v1322, 4
        %v1324 = vmax.f32 %v1322, %v1323
        %v1325 = vrot.slane %v1324, 2
        %v1326 = vmax.f32 %v1324, %v1325
        %v1327 = vrot.slane %v1326, 1
        %v1328 = vmax.f32 %v1326, %v1327
        %1329 = vset.pattern.permute.xlu0 1
        %1330 = vperm.xlu0 %1329, %v1315
        %v1331 = vpop.permute.xlu0 %1330
        %vm1332 = vcmp.eq.s32.totalorder %v1331, 1
        %v1333 = vsel %vm1332, -1e+12, %v1312
        %v1334 = vsel %vm1321, %v1333, -inf
        %v1335 = vrot.slane %v1334, 4
        %v1336 = vmax.f32 %v1334, %v1335
        %v1337 = vrot.slane %v1336, 2
        %v1338 = vmax.f32 %v1336, %v1337
        %v1339 = vrot.slane %v1338, 1
        %v1340 = vmax.f32 %v1338, %v1339
        %1342 = vrot.lane.b32.xlu0 %v1328, 96
        %v1343 = vpop.permute.xlu0 %1342
        %v1345 = vsel %vm730, %v1343, %v1340
        %v1346 = vld [vmem:[%s11] sm:$0xff]
        %v1347 = vld [vmem:[%s11 + $0x8] sm:$0xff]
        %v1348 = vld [vmem:[%s11 + $0x10] sm:$0xff]
        %v1349 = vld [vmem:[%s11 + $0x18] sm:$0xff]
        %v1350 = vld [vmem:[%s11 + $0x20] sm:$0xff]
        %v1351 = vld [vmem:[%s11 + $0x28] sm:$0xff]
        %v1352 = vld [vmem:[%s11 + $0x30] sm:$0xff]
        %v1353 = vld [vmem:[%s11 + $0x38] sm:$0xff]
        %v1354 = vld [vmem:[%s12] sm:$0x1]
        %vm1355 = vcmask 523264
        %v1357 = vsel %vm1355, %v1345, 0
        %1359 = vmatprep.subr.mxu0 0.0
        %1360 = vmatpush1.msra.mxu0 0.0
        %1361 = vmatprep.subr.mxu0 0.0
        %1362 = vmatpush1.msra.mxu0 0.0
        %1363 = vmatprep.subr.mxu0 0.0
        %1364 = vmatpush1.msra.mxu0 0.0
        %1365 = vmatprep.subr.mxu0 0.0
        %1366 = vmatpush1.msra.mxu0 0.0
        %1367 = vmatprep.subr.mxu0 0.0
        %1368 = vmatpush1.msra.mxu0 0.0
        %1369 = vmatprep.subr.mxu0 0.0
        %1370 = vmatpush1.msra.mxu0 0.0
        %1371 = vmatprep.subr.mxu0 0.0
        %1372 = vmatpush1.msra.mxu0 0.0
        %1373 = vmatprep.subr.mxu0 0.0
        %1374 = vmatpush1.msra.mxu0 0.0
        %1375 = vmatprep.subr.mxu0 0.0
        %1376 = vmatpush1.msra.mxu0 %v1353
        %1377 = vmatprep.subr.mxu0 0.0
        %1378 = vmatpush1.msra.mxu0 %v1352
        %1379 = vmatprep.subr.mxu0 0.0
        %1380 = vmatpush1.msra.mxu0 %v1351
        %1381 = vmatprep.subr.mxu0 0.0
        %1382 = vmatpush1.msra.mxu0 %v1350
        %1383 = vmatprep.subr.mxu0 0.0
        %1384 = vmatpush1.msra.mxu0 %v1349
        %1385 = vmatprep.subr.mxu0 0.0
        %1386 = vmatpush1.msra.mxu0 %v1348
        %1387 = vmatprep.subr.mxu0 0.0
        %1388 = vmatpush1.msra.mxu0 %v1347
        %1389 = vmatprep.subr.mxu0 0.0
        %1390 = vmatpush1.msra.mxu0 %v1346
        %1391 = vmatprep.subr.mxu0 0.0
        %1392 = vmatpush2.msra.mxu0 0.0
        %1393 = vmatprep.subr.mxu0 0.0
        %1394 = vmatpush2.msra.mxu0 0.0
        %1395 = vmatprep.subr.mxu0 0.0
        %1396 = vmatpush2.msra.mxu0 0.0
        %1397 = vmatprep.subr.mxu0 0.0
        %1398 = vmatpush2.msra.mxu0 0.0
        %1399 = vmatprep.subr.mxu0 0.0
        %1400 = vmatpush2.msra.mxu0 0.0
        %1401 = vmatprep.subr.mxu0 0.0
        %1402 = vmatpush2.msra.mxu0 0.0
        %1403 = vmatprep.subr.mxu0 0.0
        %1404 = vmatpush2.msra.mxu0 0.0
        %1405 = vmatprep.subr.mxu0 0.0
        %1406 = vmatpush2.msra.mxu0 0.0
        %1407 = vmatprep.subr.mxu0 0.0
        %1408 = vmatpush2.msra.mxu0 0.0
        %1409 = vmatprep.subr.mxu0 0.0
        %1410 = vmatpush2.msra.mxu0 0.0
        %1411 = vmatprep.subr.mxu0 0.0
        %1412 = vmatpush2.msra.mxu0 0.0
        %1413 = vmatprep.subr.mxu0 0.0
        %1414 = vmatpush2.msra.mxu0 0.0
        %1415 = vmatprep.subr.mxu0 0.0
        %1416 = vmatpush2.msra.mxu0 0.0
        %1417 = vmatprep.subr.mxu0 0.0
        %1418 = vmatpush2.msra.mxu0 0.0
        %1419 = vmatprep.subr.mxu0 0.0
        %1420 = vmatpush2.msra.mxu0 0.0
        %1421 = vmatprep.subr.mxu0 0.0
        %1422 = vmatpush2.msra.mxu0 0.0
        %1423 = vmatprep.mubr.f32.mxu0 0.0
        %1424 = vmatmul.mubr.f32.gmra.mxu0 %v1357
        %v1425 = vpop.f32.mrf.mxu0
        %v1426 = vadd.f32 %v1354, %v1425
        %v1427 = vpop.f32.mrf.mxu0
        %1428 = vdwg.mxu0
        %v1429 = vmax.f32 %v1426, 0.0
        %v1430 = vld [vmem:[%s13] sm:$0xff]
        %v1431 = vld [vmem:[%s13 + $0x8] sm:$0xff]
        %v1432 = vld [vmem:[%s13 + $0x10] sm:$0xff]
        %v1433 = vld [vmem:[%s13 + $0x18] sm:$0xff]
        %v1434 = vld [vmem:[%s14] sm:$0x1]
        %v1436 = vsel %vm730, %v1429, 0
        %1438 = vmatprep.subr.mxu0 0.0
        %1439 = vmatpush1.msra.mxu0 0.0
        %1440 = vmatprep.subr.mxu0 0.0
        %1441 = vmatpush1.msra.mxu0 0.0
        %1442 = vmatprep.subr.mxu0 0.0
        %1443 = vmatpush1.msra.mxu0 0.0
        %1444 = vmatprep.subr.mxu0 0.0
        %1445 = vmatpush1.msra.mxu0 0.0
        %1446 = vmatprep.subr.mxu0 0.0
        %1447 = vmatpush1.msra.mxu0 0.0
        %1448 = vmatprep.subr.mxu0 0.0
        %1449 = vmatpush1.msra.mxu0 0.0
        %1450 = vmatprep.subr.mxu0 0.0
        %1451 = vmatpush1.msra.mxu0 0.0
        %1452 = vmatprep.subr.mxu0 0.0
        %1453 = vmatpush1.msra.mxu0 0.0
        %1454 = vmatprep.subr.mxu0 0.0
        %1455 = vmatpush1.msra.mxu0 0.0
        %1456 = vmatprep.subr.mxu0 0.0
        %1457 = vmatpush1.msra.mxu0 0.0
        %1458 = vmatprep.subr.mxu0 0.0
        %1459 = vmatpush1.msra.mxu0 0.0
        %1460 = vmatprep.subr.mxu0 0.0
        %1461 = vmatpush1.msra.mxu0 0.0
        %1462 = vmatprep.subr.mxu0 0.0
        %1463 = vmatpush1.msra.mxu0 %v1433
        %1464 = vmatprep.subr.mxu0 0.0
        %1465 = vmatpush1.msra.mxu0 %v1432
        %1466 = vmatprep.subr.mxu0 0.0
        %1467 = vmatpush1.msra.mxu0 %v1431
        %1468 = vmatprep.subr.mxu0 0.0
        %1469 = vmatpush1.msra.mxu0 %v1430
        %1470 = vmatprep.subr.mxu0 0.0
        %1471 = vmatpush2.msra.mxu0 0.0
        %1472 = vmatprep.subr.mxu0 0.0
        %1473 = vmatpush2.msra.mxu0 0.0
        %1474 = vmatprep.subr.mxu0 0.0
        %1475 = vmatpush2.msra.mxu0 0.0
        %1476 = vmatprep.subr.mxu0 0.0
        %1477 = vmatpush2.msra.mxu0 0.0
        %1478 = vmatprep.subr.mxu0 0.0
        %1479 = vmatpush2.msra.mxu0 0.0
        %1480 = vmatprep.subr.mxu0 0.0
        %1481 = vmatpush2.msra.mxu0 0.0
        %1482 = vmatprep.subr.mxu0 0.0
        %1483 = vmatpush2.msra.mxu0 0.0
        %1484 = vmatprep.subr.mxu0 0.0
        %1485 = vmatpush2.msra.mxu0 0.0
        %1486 = vmatprep.subr.mxu0 0.0
        %1487 = vmatpush2.msra.mxu0 0.0
        %1488 = vmatprep.subr.mxu0 0.0
        %1489 = vmatpush2.msra.mxu0 0.0
        %1490 = vmatprep.subr.mxu0 0.0
        %1491 = vmatpush2.msra.mxu0 0.0
        %1492 = vmatprep.subr.mxu0 0.0
        %1493 = vmatpush2.msra.mxu0 0.0
        %1494 = vmatprep.subr.mxu0 0.0
        %1495 = vmatpush2.msra.mxu0 0.0
        %1496 = vmatprep.subr.mxu0 0.0
        %1497 = vmatpush2.msra.mxu0 0.0
        %1498 = vmatprep.subr.mxu0 0.0
        %1499 = vmatpush2.msra.mxu0 0.0
        %1500 = vmatprep.subr.mxu0 0.0
        %1501 = vmatpush2.msra.mxu0 0.0
        %1502 = vmatprep.mubr.f32.mxu0 0.0
        %1503 = vmatmul.mubr.f32.gmra.mxu0 %v1436
        %v1504 = vpop.f32.mrf.mxu0
        %v1505 = vadd.f32 %v1434, %v1504
        %v1506 = vpop.f32.mrf.mxu0
        %1507 = vdwg.mxu0
        %v1508 = vmax.f32 %v1505, 0.0
        %vm1509 = vcmask 253952
        %1510 = vst.msk [vmem:[%s584] sm:$0x1] %vm1509, %v1508
        %s1511 = sand.u32 %s383, 1
        %s1512 = scalar_lea.sflag [#allocation4], %s1511
        %s1513 = sand.u32 %s383, 1
        %s1514 = scalar_lea.vmem [#allocation7], %s1513
        // Predicated region
        $region89: #{tpu_custom_call.1} parent=79 // pred_check
          %p1515 = pneg %p393
        $region90: #{tpu_custom_call.1} parent=79 // pred_check_branch
          %1517 = sbr.rel (%p1515) target = $region92
        $region91: #{tpu_custom_call.1} parent=79 // pred_region
          %s1519 = ssub.s32 16, 16
          %1520 = vsyncadd %s1512, %s1519
          %s1521 = smul.addr %s35, 16
          %s1522 = scalar_lea.hbm %s15, %s1521
          %s1524 = sshll.u32 %s1514, 4
          %s1525 = int_to_ptr.vmem [resolvable:$true] %s1524
          %1527 = dma.vmem_to_hbm [thread:$0]  %s1525, 16, %s1522, %s1512
        $region92: #{tpu_custom_call.1} parent=79 // pred_fallthru
          _
      $region80: #{tpu_custom_call.1} parent=5 // pred_fallthru
        _
      %p1528 = scmp.le.s32.totalorder 2, %s30
      // Predicated region
      $region93: #{tpu_custom_call.1} parent=5 // pred_check
        %p1529 = pneg %p1528
      $region94: #{tpu_custom_call.1} parent=5 // pred_check_branch
        %1531 = sbr.rel (%p1529) target = $region96
      $region95: #{tpu_custom_call.1} parent=5 // pred_region
        %s1532 = ssub.s32 %s30, 2
        // Predicated region
        $region97: #{tpu_custom_call.1} parent=95 // pred_check
          %p1533 = pneg %p399
        $region98: #{tpu_custom_call.1} parent=95 // pred_check_branch
          %1535 = sbr.rel (%p1533) target = $region100
        $region99: #{tpu_custom_call.1} parent=95 // pred_region
          %s1536 = sand.u32 %s384, 1
          %s1537 = scalar_lea.sflag [#allocation4], %s1536
          %s1538 = sand.u32 %s384, 1
          %s1539 = scalar_lea.vmem [#allocation7], %s1538
          %1540 = dma.done %s1537, 16
        $region100: #{tpu_custom_call.1} parent=95 // pred_fallthru
          _
      $region96: #{tpu_custom_call.1} parent=5 // pred_fallthru
        _
    $region6: #{tpu_custom_call.1} parent=1 // loop_footer
      %s34 = sadd.s32 1, %s30
    $region7: #{tpu_custom_call.1} parent=1 // loop_footer_branch
      %29 = sbr.rel target = $region3
    $region8: #{tpu_custom_call.1} parent=1 // loop_exit
      _
    %1541 = vsyncpa [#allocation3], 1
    %s1542 = scalar_lea.sflag [#allocation3], 1
    %1543 = vsyncpa %s1542, 1
    %1544 = vsyncpa [#allocation6], 1
    %s1545 = scalar_lea.sflag [#allocation6], 1
    %1546 = vsyncpa %s1545, 1
    %1547 = vsyncpa [#allocation4], 1
    %s1548 = scalar_lea.sflag [#allocation4], 1
    %1549 = vsyncpa %s1548, 1

</llo_original>
